<compile_context>
chip_gen: v6e
topology: v6e:2x2x1
jax: 0.10.0
libtpu: 0.0.40
codegen_flags: <defaults>
</compile_context>

<pallas_src>
import math

import numpy as np
import jax
import jax.numpy as jnp
from jax.experimental import pallas as pl
from jax.experimental.pallas import tpu as pltpu

HID = 64  # hidden width hard-coded inside Conv_Extra


def gaussian_kernel_weights(size: int, sigma: float) -> np.ndarray:
    # Exact replica of EdgeGaussianAggregation.gaussian_kernel (incl. -size//2+1 range)
    vals = [
        [
            1.0 / (2 * math.pi * sigma ** 2)
            * math.exp(-(x ** 2 + y ** 2) / (2 * sigma ** 2))
            for x in range(-size // 2 + 1, size // 2 + 1)
        ]
        for y in range(-size // 2 + 1, size // 2 + 1)
    ]
    k = np.array(vals, dtype=np.float32)
    return k / k.sum()


def build_tap_masks(H, W, G, offsets, dtype):
    """mask[k, f] == 1 iff lane f's in-image neighbour at offsets[k]=(dy,dx) lies
    inside the HxW image.  f indexes G images concatenated along the lane axis;
    masks use per-image (global) row/col so rotation wrap-around lanes (which may
    cross image boundaries) are exactly the zeroed ones."""
    HW = H * W
    p = np.arange(G * HW) % HW
    row, col = p // W, p % W
    m = np.zeros((len(offsets), G * HW), dtype=np.float32)
    for k, (dy, dx) in enumerate(offsets):
        ok = (row + dy >= 0) & (row + dy < H) & (col + dx >= 0) & (col + dx < W)
        m[k] = ok
    return jnp.asarray(m, dtype=dtype)


def make_kernel(W, gw_flat, g_offsets, c_offsets, use_big_k, use_xlu_roll):
    def lane_shift(a, d):
        # out[:, f] = a[:, (f + d) % L]; wrapped lanes are zeroed by the tap mask.
        L = a.shape[-1]
        k = d % L
        if k == 0:
            return a
        if use_xlu_roll:
            # Single XLU lane rotation (hardware builds).  NOTE: axis must be the
            # non-negative axis index (pltpu.roll rejects axis=-1).
            return pltpu.roll(a, shift=(L - k) % L, axis=1)
        # Portable form (compiles with Mosaic and runs under TPU interpret mode):
        # two static lane slices + concat.
        return jnp.concatenate([a[:, k:], a[:, :k]], axis=1)

    def kernel(x_ref, gmask_ref, cmask_ref, ns_ref, nb_ref,
               w1_ref, s1_ref, b1_ref, w2_ref, s2_ref, b2_ref,
               w3_ref, s3_ref, b3_ref, out_ref):
        x = x_ref[0]  # (C, L) f32: channels on sublanes, G*H*W flattened on lanes

        # ---- depthwise gaussian conv: masked, shifted, weighted sum of x ----
        g = None
        for k, (dy, dx) in enumerate(g_offsets):
            d = dy * W + dx
            t = x if d == 0 else lane_shift(x, d) * gmask_ref[pl.ds(k, 1), :]
            g = gw_flat[k] * t if g is None else g + gw_flat[k] * t

        # BN(dim) + ReLU (folded running stats), then the residual add
        gaussian = jnp.maximum(g * ns_ref[...] + nb_ref[...], 0.0)
        z = x + gaussian                                             # (C, L) f32

        # ---- Conv_Extra(z) ----
        # 1x1 dim->64 (conv bias folded into BN) -> BN -> ReLU.  Kept f32: K=C is
        # tiny at the demo size; at production dim (>=16) cast z/w1 to bf16
        # (f32 MXU matmuls decompose into ~3x bf16 passes).
        h1 = jnp.dot(w1_ref[...], z, preferred_element_type=jnp.float32)
        h1 = jnp.maximum(h1 * s1_ref[...] + b1_ref[...], 0.0)        # (HID, L)

        # 3x3 64->64, pad=1: cast h1 to bf16 ONCE, build the 9 shifted taps in bf16.
        h1b = h1.astype(jnp.bfloat16)
        taps = []
        for k, (dy, dx) in enumerate(c_offsets):
            d = dy * W + dx
            if d == 0:
                taps.append(h1b)
            else:
                taps.append(lane_shift(h1b, d) * cmask_ref[pl.ds(k, 1), :])

        if use_big_k:
            # v5e/v6e: one big-K (K = 9*64 = 576) im2col matmul (best for the MRF).
            tap_mat = jnp.concatenate(taps, axis=0)                  # (9*HID, L) bf16
            h2 = jnp.dot(w2_ref[...], tap_mat, preferred_element_type=jnp.float32)
        else:
            # v7x: per-tap K=64 accumulation (MRB accumulates in place); avoids
            # materializing the (9*HID, L) tap_mat -> roughly 2x larger spatial tile.
            h2 = jnp.dot(w2_ref[0], taps[0], preferred_element_type=jnp.float32)
            for k in range(1, len(taps)):
                h2 = h2 + jnp.dot(w2_ref[k], taps[k],
                                  preferred_element_type=jnp.float32)
        h2 = jnp.maximum(h2 * s2_ref[...] + b2_ref[...], 0.0)        # (HID, L)

        # 1x1 64->dim (bias folded) -> BN (no trailing activation)
        o = jnp.dot(w3_ref[...], h2.astype(jnp.bfloat16),
                    preferred_element_type=jnp.float32)              # (C, L)
        out_ref[0] = o * s3_ref[...] + b3_ref[...]

    return kernel


def edge_gaussian_aggregation(x_nchw, params, *, group_images=None,
                              use_big_k=True, use_xlu_roll=False):
    """Eval-mode EdgeGaussianAggregation forward.  x_nchw: (N, C, H, W) float32."""
    N, C, H, W = x_nchw.shape
    HW = H * W
    size = int(params["size"])
    pad = size // 2
    gw = np.asarray(params["gw"], dtype=np.float32)

    # Batch G images side-by-side on the lane axis: matmuls see N = G*H*W lanes,
    # per-step overhead is amortized and resident weights stay hot.
    if group_images is None:
        G = max(1, min(N, 2048 // HW))
        while N % G:
            G -= 1
    else:
        G = group_images
    NG, L = N // G, G * HW
    x_grp = x_nchw.reshape(NG, G, C, HW).transpose(0, 2, 1, 3).reshape(NG, C, L)

    # Tap offsets + precomputed boundary masks (grid-invariant, built on host from
    # GLOBAL row/col -> no per-step iota / div / mod inside the kernel).
    g_offsets = [(ky - pad, kx - pad) for ky in range(size) for kx in range(size)]
    c_offsets = [(dy, dx) for dy in (-1, 0, 1) for dx in (-1, 0, 1)]
    gw_flat = [float(gw[ky, kx]) for ky in range(size) for kx in range(size)]
    gmask = build_tap_masks(H, W, G, g_offsets, jnp.float32)
    cmask = build_tap_masks(H, W, G, c_offsets, jnp.bfloat16)

    # Weights: bf16 on the FLOP-heavy matmuls (f32 accumulation kept everywhere).
    w1 = jnp.asarray(params["w1"], jnp.float32)                      # (HID, C)
    w2_oihw = jnp.asarray(params["w2_oihw"], jnp.float32)            # (HID, HID, 3, 3)
    if use_big_k:
        # im2col packing: column index (ky*3 + kx)*HID + i
        w2 = jnp.transpose(w2_oihw, (0, 2, 3, 1)).reshape(HID, 9 * HID)
        w2 = w2.astype(jnp.bfloat16)
    else:
        # per-tap packing: w2[k] = (out, in) slice for tap k = ky*3 + kx
        w2 = jnp.transpose(w2_oihw, (2, 3, 0, 1)).reshape(9, HID, HID)
        w2 = w2.astype(jnp.bfloat16)
    w3 = jnp.asarray(params["w3"], jnp.bfloat16)                     # (C, HID)

    def col(v):  # per-channel scale/bias as (ch, 1): broadcasts along the lane axis
        return jnp.asarray(v, jnp.float32).reshape(-1, 1)

    ns, nb = col(params["ns"]), col(params["nb"])
    s1, b1 = col(params["s1"]), col(params["b1"])
    s2, b2 = col(params["s2"]), col(params["b2"])
    s3, b3 = col(params["s3"]), col(params["b3"])

    kernel = make_kernel(W, gw_flat, g_offsets, c_offsets, use_big_k, use_xlu_roll)

    def resident(arr):  # weights / masks: single block, resident across grid steps
        nd = arr.ndim
        return pl.BlockSpec(arr.shape, lambda n, _nd=nd: (0,) * _nd)

    grid_spec = pltpu.PrefetchScalarGridSpec(
        num_scalar_prefetch=0,
        grid=(NG,),
        in_specs=[
            pl.BlockSpec((1, C, L), lambda n: (n, 0, 0)),    # x: one image group/step
            resident(gmask), resident(cmask),
            resident(ns), resident(nb),
            resident(w1), resident(s1), resident(b1),
            resident(w2), resident(s2), resident(b2),
            resident(w3), resident(s3), resident(b3),
        ],
        out_specs=pl.BlockSpec((1, C, L), lambda n: (n, 0, 0)),
    )
    out = pl.pallas_call(
        kernel,
        out_shape=jax.ShapeDtypeStruct((NG, C, L), jnp.float32),
        grid_spec=grid_spec,
        compiler_params=pltpu.CompilerParams(
            dimension_semantics=("parallel",),
            vmem_limit_bytes=48 * 1024 * 1024,   # explicit; safe on v5e/v6e/v7x
        ),
    )(x_grp, gmask, cmask, ns, nb, w1, s1, b1, w2, s2, b2, w3, s3, b3)

    return out.reshape(NG, C, G, HW).transpose(0, 2, 1, 3).reshape(N, C, H, W)


def reference_forward(x_nchw, params):
    """Pure-JAX reference (eval-mode, folded BN) for correctness checking."""
    N, C, H, W = x_nchw.shape
    size = int(params["size"])
    pad = size // 2
    gk = jnp.asarray(params["gw"], jnp.float32)
    wdw = jnp.tile(gk[None, None], (C, 1, 1, 1))                     # (C, 1, s, s)
    g = jax.lax.conv_general_dilated(
        x_nchw, wdw, (1, 1), [(pad, pad), (pad, pad)],
        dimension_numbers=("NCHW", "OIHW", "NCHW"), feature_group_count=C)

    def bn(t, s, b):
        return (t * jnp.asarray(s).reshape(1, -1, 1, 1)
                + jnp.asarray(b).reshape(1, -1, 1, 1))

    gaussian = jax.nn.relu(bn(g, params["ns"], params["nb"]))
    z = x_nchw + gaussian
    h1 = jax.nn.relu(bn(jnp.einsum("oc,nchw->nohw", params["w1"], z),
                        params["s1"], params["b1"]))
    h2 = jax.lax.conv_general_dilated(
        h1, params["w2_oihw"], (1, 1), [(1, 1), (1, 1)],
        dimension_numbers=("NCHW", "OIHW", "NCHW"))
    h2 = jax.nn.relu(bn(h2, params["s2"], params["b2"]))
    o = jnp.einsum("oc,nchw->nohw", params["w3"], h2)
    return bn(o, params["s3"], params["b3"])


if __name__ == "__main__":
    key = jax.random.PRNGKey(0)
    N, C, H, W = 2, 4, 16, 16          # dim = 4
    size, sigma = 3, 1.0
    keys = jax.random.split(key, 10)

    # PyTorch-convention NCHW input (kernel layout is (C, G*H*W))
    x_nchw = jax.random.normal(keys[0], (N, C, H, W), jnp.float32)

    def bn_stats(k, ch):
        k1, k2, k3, k4 = jax.random.split(k, 4)
        gamma = 1.0 + 0.1 * jax.random.normal(k1, (ch,), jnp.float32)
        beta = 0.1 * jax.random.normal(k2, (ch,), jnp.float32)
        mean = 0.1 * jax.random.normal(k3, (ch,), jnp.float32)
        var = 0.5 + jax.random.uniform(k4, (ch,), jnp.float32)
        return gamma, beta, mean, var

    def fold_bn(gamma, beta, mean, var, conv_bias=None, eps=1e-5):
        s = gamma / jnp.sqrt(var + eps)
        b = beta - mean * s
        if conv_bias is not None:
            b = b + conv_bias * s
        return s, b

    # BN(dim) applied to the gaussian conv output (no conv bias)
    ns, nb = fold_bn(*bn_stats(keys[1], C))
    # Conv_Extra: 1x1 dim->64 (bias) + BN(64)
    w1 = 0.1 * jax.random.normal(keys[2], (HID, C), jnp.float32)
    cb1 = 0.1 * jax.random.normal(keys[3], (HID,), jnp.float32)
    s1, b1 = fold_bn(*bn_stats(keys[4], HID), conv_bias=cb1)
    # Conv_Extra: 3x3 64->64 (no bias, pad=1) + BN(64); OIHW like PyTorch
    w2_oihw = 0.05 * jax.random.normal(keys[5], (HID, HID, 3, 3), jnp.float32)
    s2, b2 = fold_bn(*bn_stats(keys[6], HID))
    # Conv_Extra: 1x1 64->dim (bias) + BN(dim)
    w3 = 0.1 * jax.random.normal(keys[7], (C, HID), jnp.float32)
    cb3 = 0.1 * jax.random.normal(keys[8], (C,), jnp.float32)
    s3, b3 = fold_bn(*bn_stats(keys[9], C), conv_bias=cb3)

    params = dict(size=size, gw=gaussian_kernel_weights(size, sigma),
                  ns=ns, nb=nb, w1=w1, s1=s1, b1=b1,
                  w2_oihw=w2_oihw, s2=s2, b2=b2, w3=w3, s3=s3, b3=b3)

    ref = reference_forward(x_nchw, params)

    # big-K im2col form (v5e / v6e default)
    out_bigk = edge_gaussian_aggregation(x_nchw, params, use_big_k=True)
    jax.block_until_ready(out_bigk)
    np.testing.assert_allclose(np.asarray(out_bigk), np.asarray(ref),
                               rtol=5e-2, atol=5e-2)

    # per-tap accumulation form (v7x / MRB friendly, smallest VMEM footprint)
    out_tap = edge_gaussian_aggregation(x_nchw, params, use_big_k=False)
    jax.block_until_ready(out_tap)
    np.testing.assert_allclose(np.asarray(out_tap), np.asarray(ref),
                               rtol=5e-2, atol=5e-2)

    print("KERNEL_OK")
</pallas_src>

<mosaic_0001>
module attributes {stable_mosaic.version = 11 : i64} {
  func.func @kernel(%arg0: i32, %arg1: memref<1x4x512xf32, #tpu.memory_space<vmem>>, %arg2: memref<9x512xf32, #tpu.memory_space<vmem>>, %arg3: memref<9x512xbf16, #tpu.memory_space<vmem>>, %arg4: memref<4x1xf32, #tpu.memory_space<vmem>>, %arg5: memref<4x1xf32, #tpu.memory_space<vmem>>, %arg6: memref<64x4xf32, #tpu.memory_space<vmem>>, %arg7: memref<64x1xf32, #tpu.memory_space<vmem>>, %arg8: memref<64x1xf32, #tpu.memory_space<vmem>>, %arg9: memref<64x576xbf16, #tpu.memory_space<vmem>>, %arg10: memref<64x1xf32, #tpu.memory_space<vmem>>, %arg11: memref<64x1xf32, #tpu.memory_space<vmem>>, %arg12: memref<4x64xbf16, #tpu.memory_space<vmem>>, %arg13: memref<4x1xf32, #tpu.memory_space<vmem>>, %arg14: memref<4x1xf32, #tpu.memory_space<vmem>>, %arg15: memref<1x4x512xf32, #tpu.memory_space<vmem>>) attributes {dimension_semantics = [#tpu.dimension_semantics<parallel>], iteration_bounds = array<i64: 1>, scalar_prefetch = 0 : i64, scratch_operands = 0 : i64, tpu.core_type = #tpu.core_type<tc>, window_params = [{transform_indices = @transform_0, window_bounds = array<i64: 1, 4, 512>}, {pipeline_mode = #tpu.pipeline_mode<synchronous>, transform_indices = @transform_1, window_bounds = array<i64: 9, 512>}, {pipeline_mode = #tpu.pipeline_mode<synchronous>, transform_indices = @transform_2, window_bounds = array<i64: 9, 512>}, {pipeline_mode = #tpu.pipeline_mode<synchronous>, transform_indices = @transform_3, window_bounds = array<i64: 4, 1>}, {pipeline_mode = #tpu.pipeline_mode<synchronous>, transform_indices = @transform_4, window_bounds = array<i64: 4, 1>}, {pipeline_mode = #tpu.pipeline_mode<synchronous>, transform_indices = @transform_5, window_bounds = array<i64: 64, 4>}, {pipeline_mode = #tpu.pipeline_mode<synchronous>, transform_indices = @transform_6, window_bounds = array<i64: 64, 1>}, {pipeline_mode = #tpu.pipeline_mode<synchronous>, transform_indices = @transform_7, window_bounds = array<i64: 64, 1>}, {pipeline_mode = #tpu.pipeline_mode<synchronous>, transform_indices = @transform_8, window_bounds = array<i64: 64, 576>}, {pipeline_mode = #tpu.pipeline_mode<synchronous>, transform_indices = @transform_9, window_bounds = array<i64: 64, 1>}, {pipeline_mode = #tpu.pipeline_mode<synchronous>, transform_indices = @transform_10, window_bounds = array<i64: 64, 1>}, {pipeline_mode = #tpu.pipeline_mode<synchronous>, transform_indices = @transform_11, window_bounds = array<i64: 4, 64>}, {pipeline_mode = #tpu.pipeline_mode<synchronous>, transform_indices = @transform_12, window_bounds = array<i64: 4, 1>}, {pipeline_mode = #tpu.pipeline_mode<synchronous>, transform_indices = @transform_13, window_bounds = array<i64: 4, 1>}, {transform_indices = @transform_14, window_bounds = array<i64: 1, 4, 512>}]} {
    %c0 = arith.constant 0 : index
    %c0_0 = arith.constant 0 : index
    %c0_1 = arith.constant 0 : index
    %0 = vector.load %arg1[%c0, %c0_0, %c0_1] : memref<1x4x512xf32, #tpu.memory_space<vmem>>, vector<1x4x512xf32>
    %1 = vector.shape_cast %0 : vector<1x4x512xf32> to vector<4x512xf32>
    %2 = vector.extract_strided_slice %1 {offsets = [0, 495], sizes = [4, 17], strides = [1, 1]} : vector<4x512xf32> to vector<4x17xf32>
    %3 = vector.extract_strided_slice %1 {offsets = [0, 0], sizes = [4, 495], strides = [1, 1]} : vector<4x512xf32> to vector<4x495xf32>
    %4 = tpu.concatenate %2, %3 in 1 : vector<4x17xf32>, vector<4x495xf32> -> vector<4x512xf32>
    %c0_2 = arith.constant 0 : index
    %c0_3 = arith.constant 0 : index
    %5 = vector.load %arg2[%c0_2, %c0_3] : memref<9x512xf32, #tpu.memory_space<vmem>>, vector<1x512xf32>
    %6 = vector.broadcast %5 : vector<1x512xf32> to vector<4x512xf32>
    %7 = arith.mulf %4, %6 : vector<4x512xf32>
    %cst = arith.constant 0.0751136169 : f32
    %8 = vector.broadcast %cst : f32 to vector<4x512xf32>
    %9 = arith.mulf %8, %7 : vector<4x512xf32>
    %10 = vector.extract_strided_slice %1 {offsets = [0, 496], sizes = [4, 16], strides = [1, 1]} : vector<4x512xf32> to vector<4x16xf32>
    %11 = vector.extract_strided_slice %1 {offsets = [0, 0], sizes = [4, 496], strides = [1, 1]} : vector<4x512xf32> to vector<4x496xf32>
    %12 = tpu.concatenate %10, %11 in 1 : vector<4x16xf32>, vector<4x496xf32> -> vector<4x512xf32>
    %c1 = arith.constant 1 : index
    %c0_4 = arith.constant 0 : index
    %13 = vector.load %arg2[%c1, %c0_4] : memref<9x512xf32, #tpu.memory_space<vmem>>, vector<1x512xf32>
    %14 = vector.broadcast %13 : vector<1x512xf32> to vector<4x512xf32>
    %15 = arith.mulf %12, %14 : vector<4x512xf32>
    %cst_5 = arith.constant 0.123841412 : f32
    %16 = vector.broadcast %cst_5 : f32 to vector<4x512xf32>
    %17 = arith.mulf %16, %15 : vector<4x512xf32>
    %18 = arith.addf %9, %17 : vector<4x512xf32>
    %19 = vector.extract_strided_slice %1 {offsets = [0, 497], sizes = [4, 15], strides = [1, 1]} : vector<4x512xf32> to vector<4x15xf32>
    %20 = vector.extract_strided_slice %1 {offsets = [0, 0], sizes = [4, 497], strides = [1, 1]} : vector<4x512xf32> to vector<4x497xf32>
    %21 = tpu.concatenate %19, %20 in 1 : vector<4x15xf32>, vector<4x497xf32> -> vector<4x512xf32>
    %c2 = arith.constant 2 : index
    %c0_6 = arith.constant 0 : index
    %22 = vector.load %arg2[%c2, %c0_6] : memref<9x512xf32, #tpu.memory_space<vmem>>, vector<1x512xf32>
    %23 = vector.broadcast %22 : vector<1x512xf32> to vector<4x512xf32>
    %24 = arith.mulf %21, %23 : vector<4x512xf32>
    %cst_7 = arith.constant 0.0751136169 : f32
    %25 = vector.broadcast %cst_7 : f32 to vector<4x512xf32>
    %26 = arith.mulf %25, %24 : vector<4x512xf32>
    %27 = arith.addf %18, %26 : vector<4x512xf32>
    %28 = vector.extract_strided_slice %1 {offsets = [0, 511], sizes = [4, 1], strides = [1, 1]} : vector<4x512xf32> to vector<4x1xf32>
    %29 = vector.extract_strided_slice %1 {offsets = [0, 0], sizes = [4, 511], strides = [1, 1]} : vector<4x512xf32> to vector<4x511xf32>
    %30 = tpu.concatenate %28, %29 in 1 : vector<4x1xf32>, vector<4x511xf32> -> vector<4x512xf32>
    %c3 = arith.constant 3 : index
    %c0_8 = arith.constant 0 : index
    %31 = vector.load %arg2[%c3, %c0_8] : memref<9x512xf32, #tpu.memory_space<vmem>>, vector<1x512xf32>
    %32 = vector.broadcast %31 : vector<1x512xf32> to vector<4x512xf32>
    %33 = arith.mulf %30, %32 : vector<4x512xf32>
    %cst_9 = arith.constant 0.123841412 : f32
    %34 = vector.broadcast %cst_9 : f32 to vector<4x512xf32>
    %35 = arith.mulf %34, %33 : vector<4x512xf32>
    %36 = arith.addf %27, %35 : vector<4x512xf32>
    %cst_10 = arith.constant 0.204179958 : f32
    %37 = vector.broadcast %cst_10 : f32 to vector<4x512xf32>
    %38 = arith.mulf %37, %1 : vector<4x512xf32>
    %39 = arith.addf %36, %38 : vector<4x512xf32>
    %40 = vector.extract_strided_slice %1 {offsets = [0, 1], sizes = [4, 511], strides = [1, 1]} : vector<4x512xf32> to vector<4x511xf32>
    %41 = vector.extract_strided_slice %1 {offsets = [0, 0], sizes = [4, 1], strides = [1, 1]} : vector<4x512xf32> to vector<4x1xf32>
    %42 = tpu.concatenate %40, %41 in 1 : vector<4x511xf32>, vector<4x1xf32> -> vector<4x512xf32>
    %c5 = arith.constant 5 : index
    %c0_11 = arith.constant 0 : index
    %43 = vector.load %arg2[%c5, %c0_11] : memref<9x512xf32, #tpu.memory_space<vmem>>, vector<1x512xf32>
    %44 = vector.broadcast %43 : vector<1x512xf32> to vector<4x512xf32>
    %45 = arith.mulf %42, %44 : vector<4x512xf32>
    %cst_12 = arith.constant 0.123841412 : f32
    %46 = vector.broadcast %cst_12 : f32 to vector<4x512xf32>
    %47 = arith.mulf %46, %45 : vector<4x512xf32>
    %48 = arith.addf %39, %47 : vector<4x512xf32>
    %49 = vector.extract_strided_slice %1 {offsets = [0, 15], sizes = [4, 497], strides = [1, 1]} : vector<4x512xf32> to vector<4x497xf32>
    %50 = vector.extract_strided_slice %1 {offsets = [0, 0], sizes = [4, 15], strides = [1, 1]} : vector<4x512xf32> to vector<4x15xf32>
    %51 = tpu.concatenate %49, %50 in 1 : vector<4x497xf32>, vector<4x15xf32> -> vector<4x512xf32>
    %c6 = arith.constant 6 : index
    %c0_13 = arith.constant 0 : index
    %52 = vector.load %arg2[%c6, %c0_13] : memref<9x512xf32, #tpu.memory_space<vmem>>, vector<1x512xf32>
    %53 = vector.broadcast %52 : vector<1x512xf32> to vector<4x512xf32>
    %54 = arith.mulf %51, %53 : vector<4x512xf32>
    %cst_14 = arith.constant 0.0751136169 : f32
    %55 = vector.broadcast %cst_14 : f32 to vector<4x512xf32>
    %56 = arith.mulf %55, %54 : vector<4x512xf32>
    %57 = arith.addf %48, %56 : vector<4x512xf32>
    %58 = vector.extract_strided_slice %1 {offsets = [0, 16], sizes = [4, 496], strides = [1, 1]} : vector<4x512xf32> to vector<4x496xf32>
    %59 = vector.extract_strided_slice %1 {offsets = [0, 0], sizes = [4, 16], strides = [1, 1]} : vector<4x512xf32> to vector<4x16xf32>
    %60 = tpu.concatenate %58, %59 in 1 : vector<4x496xf32>, vector<4x16xf32> -> vector<4x512xf32>
    %c7 = arith.constant 7 : index
    %c0_15 = arith.constant 0 : index
    %61 = vector.load %arg2[%c7, %c0_15] : memref<9x512xf32, #tpu.memory_space<vmem>>, vector<1x512xf32>
    %62 = vector.broadcast %61 : vector<1x512xf32> to vector<4x512xf32>
    %63 = arith.mulf %60, %62 : vector<4x512xf32>
    %cst_16 = arith.constant 0.123841412 : f32
    %64 = vector.broadcast %cst_16 : f32 to vector<4x512xf32>
    %65 = arith.mulf %64, %63 : vector<4x512xf32>
    %66 = arith.addf %57, %65 : vector<4x512xf32>
    %67 = vector.extract_strided_slice %1 {offsets = [0, 17], sizes = [4, 495], strides = [1, 1]} : vector<4x512xf32> to vector<4x495xf32>
    %68 = vector.extract_strided_slice %1 {offsets = [0, 0], sizes = [4, 17], strides = [1, 1]} : vector<4x512xf32> to vector<4x17xf32>
    %69 = tpu.concatenate %67, %68 in 1 : vector<4x495xf32>, vector<4x17xf32> -> vector<4x512xf32>
    %c8 = arith.constant 8 : index
    %c0_17 = arith.constant 0 : index
    %70 = vector.load %arg2[%c8, %c0_17] : memref<9x512xf32, #tpu.memory_space<vmem>>, vector<1x512xf32>
    %71 = vector.broadcast %70 : vector<1x512xf32> to vector<4x512xf32>
    %72 = arith.mulf %69, %71 : vector<4x512xf32>
    %cst_18 = arith.constant 0.0751136169 : f32
    %73 = vector.broadcast %cst_18 : f32 to vector<4x512xf32>
    %74 = arith.mulf %73, %72 : vector<4x512xf32>
    %75 = arith.addf %66, %74 : vector<4x512xf32>
    %c0_19 = arith.constant 0 : index
    %c0_20 = arith.constant 0 : index
    %76 = vector.load %arg4[%c0_19, %c0_20] : memref<4x1xf32, #tpu.memory_space<vmem>>, vector<4x1xf32>
    %77 = vector.broadcast %76 : vector<4x1xf32> to vector<4x512xf32>
    %78 = arith.mulf %75, %77 : vector<4x512xf32>
    %c0_21 = arith.constant 0 : index
    %c0_22 = arith.constant 0 : index
    %79 = vector.load %arg5[%c0_21, %c0_22] : memref<4x1xf32, #tpu.memory_space<vmem>>, vector<4x1xf32>
    %80 = vector.broadcast %79 : vector<4x1xf32> to vector<4x512xf32>
    %81 = arith.addf %78, %80 : vector<4x512xf32>
    %cst_23 = arith.constant 0.000000e+00 : f32
    %82 = vector.broadcast %cst_23 : f32 to vector<4x512xf32>
    %83 = arith.maximumf %81, %82 : vector<4x512xf32>
    %84 = arith.addf %1, %83 : vector<4x512xf32>
    %c0_24 = arith.constant 0 : index
    %c0_25 = arith.constant 0 : index
    %85 = vector.load %arg6[%c0_24, %c0_25] : memref<64x4xf32, #tpu.memory_space<vmem>>, vector<64x4xf32>
    %cst_26 = arith.constant dense<0.000000e+00> : vector<64x512xf32>
    %86 = tpu.matmul %85, %84, %cst_26 {dimension_numbers = #tpu.dot_dimension_numbers<[1], [0], [0], [1], [0, 0, 1, 1], [], []>} : vector<64x4xf32>, vector<4x512xf32>, vector<64x512xf32> -> vector<64x512xf32>
    %c0_27 = arith.constant 0 : index
    %c0_28 = arith.constant 0 : index
    %87 = vector.load %arg7[%c0_27, %c0_28] : memref<64x1xf32, #tpu.memory_space<vmem>>, vector<64x1xf32>
    %88 = vector.broadcast %87 : vector<64x1xf32> to vector<64x512xf32>
    %89 = arith.mulf %86, %88 : vector<64x512xf32>
    %c0_29 = arith.constant 0 : index
    %c0_30 = arith.constant 0 : index
    %90 = vector.load %arg8[%c0_29, %c0_30] : memref<64x1xf32, #tpu.memory_space<vmem>>, vector<64x1xf32>
    %91 = vector.broadcast %90 : vector<64x1xf32> to vector<64x512xf32>
    %92 = arith.addf %89, %91 : vector<64x512xf32>
    %cst_31 = arith.constant 0.000000e+00 : f32
    %93 = vector.broadcast %cst_31 : f32 to vector<64x512xf32>
    %94 = arith.maximumf %92, %93 : vector<64x512xf32>
    %95 = arith.truncf %94 : vector<64x512xf32> to vector<64x512xbf16>
    %96 = vector.extract_strided_slice %95 {offsets = [0, 495], sizes = [64, 17], strides = [1, 1]} : vector<64x512xbf16> to vector<64x17xbf16>
    %97 = vector.extract_strided_slice %95 {offsets = [0, 0], sizes = [64, 495], strides = [1, 1]} : vector<64x512xbf16> to vector<64x495xbf16>
    %98 = tpu.concatenate %96, %97 in 1 : vector<64x17xbf16>, vector<64x495xbf16> -> vector<64x512xbf16>
    %c0_32 = arith.constant 0 : index
    %c0_33 = arith.constant 0 : index
    %99 = vector.load %arg3[%c0_32, %c0_33] : memref<9x512xbf16, #tpu.memory_space<vmem>>, vector<1x512xbf16>
    %100 = vector.broadcast %99 : vector<1x512xbf16> to vector<64x512xbf16>
    %101 = arith.mulf %98, %100 : vector<64x512xbf16>
    %102 = vector.extract_strided_slice %95 {offsets = [0, 496], sizes = [64, 16], strides = [1, 1]} : vector<64x512xbf16> to vector<64x16xbf16>
    %103 = vector.extract_strided_slice %95 {offsets = [0, 0], sizes = [64, 496], strides = [1, 1]} : vector<64x512xbf16> to vector<64x496xbf16>
    %104 = tpu.concatenate %102, %103 in 1 : vector<64x16xbf16>, vector<64x496xbf16> -> vector<64x512xbf16>
    %c1_34 = arith.constant 1 : index
    %c0_35 = arith.constant 0 : index
    %105 = vector.load %arg3[%c1_34, %c0_35] : memref<9x512xbf16, #tpu.memory_space<vmem>>, vector<1x512xbf16>
    %106 = vector.broadcast %105 : vector<1x512xbf16> to vector<64x512xbf16>
    %107 = arith.mulf %104, %106 : vector<64x512xbf16>
    %108 = vector.extract_strided_slice %95 {offsets = [0, 497], sizes = [64, 15], strides = [1, 1]} : vector<64x512xbf16> to vector<64x15xbf16>
    %109 = vector.extract_strided_slice %95 {offsets = [0, 0], sizes = [64, 497], strides = [1, 1]} : vector<64x512xbf16> to vector<64x497xbf16>
    %110 = tpu.concatenate %108, %109 in 1 : vector<64x15xbf16>, vector<64x497xbf16> -> vector<64x512xbf16>
    %c2_36 = arith.constant 2 : index
    %c0_37 = arith.constant 0 : index
    %111 = vector.load %arg3[%c2_36, %c0_37] : memref<9x512xbf16, #tpu.memory_space<vmem>>, vector<1x512xbf16>
    %112 = vector.broadcast %111 : vector<1x512xbf16> to vector<64x512xbf16>
    %113 = arith.mulf %110, %112 : vector<64x512xbf16>
    %114 = vector.extract_strided_slice %95 {offsets = [0, 511], sizes = [64, 1], strides = [1, 1]} : vector<64x512xbf16> to vector<64x1xbf16>
    %115 = vector.extract_strided_slice %95 {offsets = [0, 0], sizes = [64, 511], strides = [1, 1]} : vector<64x512xbf16> to vector<64x511xbf16>
    %116 = tpu.concatenate %114, %115 in 1 : vector<64x1xbf16>, vector<64x511xbf16> -> vector<64x512xbf16>
    %c3_38 = arith.constant 3 : index
    %c0_39 = arith.constant 0 : index
    %117 = vector.load %arg3[%c3_38, %c0_39] : memref<9x512xbf16, #tpu.memory_space<vmem>>, vector<1x512xbf16>
    %118 = vector.broadcast %117 : vector<1x512xbf16> to vector<64x512xbf16>
    %119 = arith.mulf %116, %118 : vector<64x512xbf16>
    %120 = vector.extract_strided_slice %95 {offsets = [0, 1], sizes = [64, 511], strides = [1, 1]} : vector<64x512xbf16> to vector<64x511xbf16>
    %121 = vector.extract_strided_slice %95 {offsets = [0, 0], sizes = [64, 1], strides = [1, 1]} : vector<64x512xbf16> to vector<64x1xbf16>
    %122 = tpu.concatenate %120, %121 in 1 : vector<64x511xbf16>, vector<64x1xbf16> -> vector<64x512xbf16>
    %c5_40 = arith.constant 5 : index
    %c0_41 = arith.constant 0 : index
    %123 = vector.load %arg3[%c5_40, %c0_41] : memref<9x512xbf16, #tpu.memory_space<vmem>>, vector<1x512xbf16>
    %124 = vector.broadcast %123 : vector<1x512xbf16> to vector<64x512xbf16>
    %125 = arith.mulf %122, %124 : vector<64x512xbf16>
    %126 = vector.extract_strided_slice %95 {offsets = [0, 15], sizes = [64, 497], strides = [1, 1]} : vector<64x512xbf16> to vector<64x497xbf16>
    %127 = vector.extract_strided_slice %95 {offsets = [0, 0], sizes = [64, 15], strides = [1, 1]} : vector<64x512xbf16> to vector<64x15xbf16>
    %128 = tpu.concatenate %126, %127 in 1 : vector<64x497xbf16>, vector<64x15xbf16> -> vector<64x512xbf16>
    %c6_42 = arith.constant 6 : index
    %c0_43 = arith.constant 0 : index
    %129 = vector.load %arg3[%c6_42, %c0_43] : memref<9x512xbf16, #tpu.memory_space<vmem>>, vector<1x512xbf16>
    %130 = vector.broadcast %129 : vector<1x512xbf16> to vector<64x512xbf16>
    %131 = arith.mulf %128, %130 : vector<64x512xbf16>
    %132 = vector.extract_strided_slice %95 {offsets = [0, 16], sizes = [64, 496], strides = [1, 1]} : vector<64x512xbf16> to vector<64x496xbf16>
    %133 = vector.extract_strided_slice %95 {offsets = [0, 0], sizes = [64, 16], strides = [1, 1]} : vector<64x512xbf16> to vector<64x16xbf16>
    %134 = tpu.concatenate %132, %133 in 1 : vector<64x496xbf16>, vector<64x16xbf16> -> vector<64x512xbf16>
    %c7_44 = arith.constant 7 : index
    %c0_45 = arith.constant 0 : index
    %135 = vector.load %arg3[%c7_44, %c0_45] : memref<9x512xbf16, #tpu.memory_space<vmem>>, vector<1x512xbf16>
    %136 = vector.broadcast %135 : vector<1x512xbf16> to vector<64x512xbf16>
    %137 = arith.mulf %134, %136 : vector<64x512xbf16>
    %138 = vector.extract_strided_slice %95 {offsets = [0, 17], sizes = [64, 495], strides = [1, 1]} : vector<64x512xbf16> to vector<64x495xbf16>
    %139 = vector.extract_strided_slice %95 {offsets = [0, 0], sizes = [64, 17], strides = [1, 1]} : vector<64x512xbf16> to vector<64x17xbf16>
    %140 = tpu.concatenate %138, %139 in 1 : vector<64x495xbf16>, vector<64x17xbf16> -> vector<64x512xbf16>
    %c8_46 = arith.constant 8 : index
    %c0_47 = arith.constant 0 : index
    %141 = vector.load %arg3[%c8_46, %c0_47] : memref<9x512xbf16, #tpu.memory_space<vmem>>, vector<1x512xbf16>
    %142 = vector.broadcast %141 : vector<1x512xbf16> to vector<64x512xbf16>
    %143 = arith.mulf %140, %142 : vector<64x512xbf16>
    %144 = tpu.concatenate %101, %107, %113, %119, %95, %125, %131, %137, %143 in 0 : vector<64x512xbf16>, vector<64x512xbf16>, vector<64x512xbf16>, vector<64x512xbf16>, vector<64x512xbf16>, vector<64x512xbf16>, vector<64x512xbf16>, vector<64x512xbf16>, vector<64x512xbf16> -> vector<576x512xbf16>
    %c0_48 = arith.constant 0 : index
    %c0_49 = arith.constant 0 : index
    %145 = vector.load %arg9[%c0_48, %c0_49] : memref<64x576xbf16, #tpu.memory_space<vmem>>, vector<64x576xbf16>
    %cst_50 = arith.constant dense<0.000000e+00> : vector<64x512xf32>
    %146 = tpu.matmul %145, %144, %cst_50 {dimension_numbers = #tpu.dot_dimension_numbers<[1], [0], [0], [1], [0, 0, 1, 1], [], []>} : vector<64x576xbf16>, vector<576x512xbf16>, vector<64x512xf32> -> vector<64x512xf32>
    %c0_51 = arith.constant 0 : index
    %c0_52 = arith.constant 0 : index
    %147 = vector.load %arg10[%c0_51, %c0_52] : memref<64x1xf32, #tpu.memory_space<vmem>>, vector<64x1xf32>
    %148 = vector.broadcast %147 : vector<64x1xf32> to vector<64x512xf32>
    %149 = arith.mulf %146, %148 : vector<64x512xf32>
    %c0_53 = arith.constant 0 : index
    %c0_54 = arith.constant 0 : index
    %150 = vector.load %arg11[%c0_53, %c0_54] : memref<64x1xf32, #tpu.memory_space<vmem>>, vector<64x1xf32>
    %151 = vector.broadcast %150 : vector<64x1xf32> to vector<64x512xf32>
    %152 = arith.addf %149, %151 : vector<64x512xf32>
    %cst_55 = arith.constant 0.000000e+00 : f32
    %153 = vector.broadcast %cst_55 : f32 to vector<64x512xf32>
    %154 = arith.maximumf %152, %153 : vector<64x512xf32>
    %c0_56 = arith.constant 0 : index
    %c0_57 = arith.constant 0 : index
    %155 = vector.load %arg12[%c0_56, %c0_57] : memref<4x64xbf16, #tpu.memory_space<vmem>>, vector<4x64xbf16>
    %156 = arith.truncf %154 : vector<64x512xf32> to vector<64x512xbf16>
    %cst_58 = arith.constant dense<0.000000e+00> : vector<4x512xf32>
    %157 = tpu.matmul %155, %156, %cst_58 {dimension_numbers = #tpu.dot_dimension_numbers<[1], [0], [0], [1], [0, 0, 1, 1], [], []>} : vector<4x64xbf16>, vector<64x512xbf16>, vector<4x512xf32> -> vector<4x512xf32>
    %c0_59 = arith.constant 0 : index
    %c0_60 = arith.constant 0 : index
    %158 = vector.load %arg13[%c0_59, %c0_60] : memref<4x1xf32, #tpu.memory_space<vmem>>, vector<4x1xf32>
    %159 = vector.broadcast %158 : vector<4x1xf32> to vector<4x512xf32>
    %160 = arith.mulf %157, %159 : vector<4x512xf32>
    %c0_61 = arith.constant 0 : index
    %c0_62 = arith.constant 0 : index
    %161 = vector.load %arg14[%c0_61, %c0_62] : memref<4x1xf32, #tpu.memory_space<vmem>>, vector<4x1xf32>
    %162 = vector.broadcast %161 : vector<4x1xf32> to vector<4x512xf32>
    %163 = arith.addf %160, %162 : vector<4x512xf32>
    %c0_63 = arith.constant 0 : index
    %c0_64 = arith.constant 0 : index
    %c0_65 = arith.constant 0 : index
    %164 = vector.load %arg15[%c0_63, %c0_64, %c0_65] : memref<1x4x512xf32, #tpu.memory_space<vmem>>, vector<1x4x512xf32>
    %165 = vector.shape_cast %164 : vector<1x4x512xf32> to vector<4x512xf32>
    %166 = vector.shape_cast %163 : vector<4x512xf32> to vector<1x4x512xf32>
    tpu.vector_store %arg15[%c0_63, %c0_64, %c0_65], %166 {strides = array<i32>} : memref<1x4x512xf32, #tpu.memory_space<vmem>>, vector<1x4x512xf32>,
    return
  }
  func.func @transform_0(%arg0: i32) -> (i32, i32, i32) {
    %c0_i32 = arith.constant 0 : i32
    %c0_i32_0 = arith.constant 0 : i32
    %c0_i32_1 = arith.constant 0 : i32
    return %arg0, %c0_i32, %c0_i32_0 : i32, i32, i32
  }
  func.func @transform_1(%arg0: i32) -> (i32, i32) {
    %c0_i32 = arith.constant 0 : i32
    %c0_i32_0 = arith.constant 0 : i32
    %c0_i32_1 = arith.constant 0 : i32
    return %c0_i32, %c0_i32_0 : i32, i32
  }
  func.func @transform_2(%arg0: i32) -> (i32, i32) {
    %c0_i32 = arith.constant 0 : i32
    %c0_i32_0 = arith.constant 0 : i32
    %c0_i32_1 = arith.constant 0 : i32
    return %c0_i32, %c0_i32_0 : i32, i32
  }
  func.func @transform_3(%arg0: i32) -> (i32, i32) {
    %c0_i32 = arith.constant 0 : i32
    %c0_i32_0 = arith.constant 0 : i32
    %c0_i32_1 = arith.constant 0 : i32
    return %c0_i32, %c0_i32_0 : i32, i32
  }
  func.func @transform_4(%arg0: i32) -> (i32, i32) {
    %c0_i32 = arith.constant 0 : i32
    %c0_i32_0 = arith.constant 0 : i32
    %c0_i32_1 = arith.constant 0 : i32
    return %c0_i32, %c0_i32_0 : i32, i32
  }
  func.func @transform_5(%arg0: i32) -> (i32, i32) {
    %c0_i32 = arith.constant 0 : i32
    %c0_i32_0 = arith.constant 0 : i32
    %c0_i32_1 = arith.constant 0 : i32
    return %c0_i32, %c0_i32_0 : i32, i32
  }
  func.func @transform_6(%arg0: i32) -> (i32, i32) {
    %c0_i32 = arith.constant 0 : i32
    %c0_i32_0 = arith.constant 0 : i32
    %c0_i32_1 = arith.constant 0 : i32
    return %c0_i32, %c0_i32_0 : i32, i32
  }
  func.func @transform_7(%arg0: i32) -> (i32, i32) {
    %c0_i32 = arith.constant 0 : i32
    %c0_i32_0 = arith.constant 0 : i32
    %c0_i32_1 = arith.constant 0 : i32
    return %c0_i32, %c0_i32_0 : i32, i32
  }
  func.func @transform_8(%arg0: i32) -> (i32, i32) {
    %c0_i32 = arith.constant 0 : i32
    %c0_i32_0 = arith.constant 0 : i32
    %c0_i32_1 = arith.constant 0 : i32
    return %c0_i32, %c0_i32_0 : i32, i32
  }
  func.func @transform_9(%arg0: i32) -> (i32, i32) {
    %c0_i32 = arith.constant 0 : i32
    %c0_i32_0 = arith.constant 0 : i32
    %c0_i32_1 = arith.constant 0 : i32
    return %c0_i32, %c0_i32_0 : i32, i32
  }
  func.func @transform_10(%arg0: i32) -> (i32, i32) {
    %c0_i32 = arith.constant 0 : i32
    %c0_i32_0 = arith.constant 0 : i32
    %c0_i32_1 = arith.constant 0 : i32
    return %c0_i32, %c0_i32_0 : i32, i32
  }
  func.func @transform_11(%arg0: i32) -> (i32, i32) {
    %c0_i32 = arith.constant 0 : i32
    %c0_i32_0 = arith.constant 0 : i32
    %c0_i32_1 = arith.constant 0 : i32
    return %c0_i32, %c0_i32_0 : i32, i32
  }
  func.func @transform_12(%arg0: i32) -> (i32, i32) {
    %c0_i32 = arith.constant 0 : i32
    %c0_i32_0 = arith.constant 0 : i32
    %c0_i32_1 = arith.constant 0 : i32
    return %c0_i32, %c0_i32_0 : i32, i32
  }
  func.func @transform_13(%arg0: i32) -> (i32, i32) {
    %c0_i32 = arith.constant 0 : i32
    %c0_i32_0 = arith.constant 0 : i32
    %c0_i32_1 = arith.constant 0 : i32
    return %c0_i32, %c0_i32_0 : i32, i32
  }
  func.func @transform_14(%arg0: i32) -> (i32, i32, i32) {
    %c0_i32 = arith.constant 0 : i32
    %c0_i32_0 = arith.constant 0 : i32
    %c0_i32_1 = arith.constant 0 : i32
    return %arg0, %c0_i32, %c0_i32_0 : i32, i32, i32
  }
}

</mosaic_0001>

<llo_original>
// kernel: tpu_custom_call.1
$region0: #{tpu_custom_call.1}
  #allocation0 [shape = 'u32[]', space=smem, size = 0x4, offset = 0x4, fixed_abs, tag = 'smem constant byte address 0x4 - core index']
  #allocation1 [shape = 'u32[144,128]{1,0:T(1,128)}', space=vmem, size = 0x12000, scoped, tag = 'internal scratch']
  %s0 = inlined_call_operand.vmem [shape: f32[1,4,512], index: 0, kind: input, shape index: {}]
  %s1 = inlined_call_operand.vmem [shape: f32[9,512], index: 1, kind: input, shape index: {}]
  %s2 = inlined_call_operand.vmem [shape: bf16[9,512], index: 2, kind: input, shape index: {}]
  %s3 = inlined_call_operand.vmem [shape: f32[4,1], index: 3, kind: input, shape index: {}]
  %s4 = inlined_call_operand.vmem [shape: f32[4,1], index: 4, kind: input, shape index: {}]
  %s5 = inlined_call_operand.vmem [shape: f32[64,4], index: 5, kind: input, shape index: {}]
  %s6 = inlined_call_operand.vmem [shape: f32[64,1], index: 6, kind: input, shape index: {}]
  %s7 = inlined_call_operand.vmem [shape: f32[64,1], index: 7, kind: input, shape index: {}]
  %s8 = inlined_call_operand.vmem [shape: bf16[64,576], index: 8, kind: input, shape index: {}]
  %s9 = inlined_call_operand.vmem [shape: f32[64,1], index: 9, kind: input, shape index: {}]
  %s10 = inlined_call_operand.vmem [shape: f32[64,1], index: 10, kind: input, shape index: {}]
  %s11 = inlined_call_operand.vmem [shape: bf16[4,64], index: 11, kind: input, shape index: {}]
  %s12 = inlined_call_operand.vmem [shape: f32[4,1], index: 12, kind: input, shape index: {}]
  %s13 = inlined_call_operand.vmem [shape: f32[4,1], index: 13, kind: input, shape index: {}]
  %s14 = inlined_call_operand.hbm [shape: f32[1,4,512], index: 14, kind: output, shape index: {}]
  %s15 = sld [smem:[#allocation0]]
  $region66: #{tpu_custom_call.1} parent=0
    _
  %s17 = ssub.s32 1, %s15
  %s18 = scalar_select 0, %s17, %s15
  $region1: #{tpu_custom_call.1} parent=0
    #allocation2 [shape = 'u8[8192]{0}', space=vmem, size = 0x2000, scoped, tag = 'output window, operand 0, single buffered']
    #allocation3 [shape = 's32[1]{0}', space=sflag, size = 0x4, scoped, tag = 'scoped memory for tpu_custom_call.1']
    %19 = vsyncpa [#allocation3], 0
    // Predicated region
    $region2: #{tpu_custom_call.1} parent=1 // pred_check
      _
    $region3: #{tpu_custom_call.1} parent=1 // pred_check_branch
      %21 = sbr.rel (0) target = $region5
    $region4: #{tpu_custom_call.1} parent=1 // pred_region
      _
    $region5: #{tpu_custom_call.1} parent=1 // pred_fallthru
      _
    // Predicated region
    $region6: #{tpu_custom_call.1} parent=1 // pred_check
      _
    $region7: #{tpu_custom_call.1} parent=1 // pred_check_branch
      %23 = sbr.rel (0) target = $region9
    $region8: #{tpu_custom_call.1} parent=1 // pred_region
      _
    $region9: #{tpu_custom_call.1} parent=1 // pred_fallthru
      _
    // Predicated region
    $region10: #{tpu_custom_call.1} parent=1 // pred_check
      _
    $region11: #{tpu_custom_call.1} parent=1 // pred_check_branch
      %25 = sbr.rel (0) target = $region13
    $region12: #{tpu_custom_call.1} parent=1 // pred_region
      _
    $region13: #{tpu_custom_call.1} parent=1 // pred_fallthru
      _
    // Predicated region
    $region14: #{tpu_custom_call.1} parent=1 // pred_check
      _
    $region15: #{tpu_custom_call.1} parent=1 // pred_check_branch
      %27 = sbr.rel (0) target = $region17
    $region16: #{tpu_custom_call.1} parent=1 // pred_region
      _
    $region17: #{tpu_custom_call.1} parent=1 // pred_fallthru
      _
    // Predicated region
    $region18: #{tpu_custom_call.1} parent=1 // pred_check
      _
    $region19: #{tpu_custom_call.1} parent=1 // pred_check_branch
      %29 = sbr.rel (0) target = $region21
    $region20: #{tpu_custom_call.1} parent=1 // pred_region
      _
    $region21: #{tpu_custom_call.1} parent=1 // pred_fallthru
      _
    // Predicated region
    $region22: #{tpu_custom_call.1} parent=1 // pred_check
      _
    $region23: #{tpu_custom_call.1} parent=1 // pred_check_branch
      %31 = sbr.rel (0) target = $region25
    $region24: #{tpu_custom_call.1} parent=1 // pred_region
      _
    $region25: #{tpu_custom_call.1} parent=1 // pred_fallthru
      _
    // Predicated region
    $region26: #{tpu_custom_call.1} parent=1 // pred_check
      _
    $region27: #{tpu_custom_call.1} parent=1 // pred_check_branch
      %33 = sbr.rel (0) target = $region29
    $region28: #{tpu_custom_call.1} parent=1 // pred_region
      _
    $region29: #{tpu_custom_call.1} parent=1 // pred_fallthru
      _
    // Predicated region
    $region30: #{tpu_custom_call.1} parent=1 // pred_check
      _
    $region31: #{tpu_custom_call.1} parent=1 // pred_check_branch
      %35 = sbr.rel (0) target = $region33
    $region32: #{tpu_custom_call.1} parent=1 // pred_region
      _
    $region33: #{tpu_custom_call.1} parent=1 // pred_fallthru
      _
    // Predicated region
    $region34: #{tpu_custom_call.1} parent=1 // pred_check
      _
    $region35: #{tpu_custom_call.1} parent=1 // pred_check_branch
      %37 = sbr.rel (0) target = $region37
    $region36: #{tpu_custom_call.1} parent=1 // pred_region
      _
    $region37: #{tpu_custom_call.1} parent=1 // pred_fallthru
      _
    // Predicated region
    $region38: #{tpu_custom_call.1} parent=1 // pred_check
      _
    $region39: #{tpu_custom_call.1} parent=1 // pred_check_branch
      %39 = sbr.rel (0) target = $region41
    $region40: #{tpu_custom_call.1} parent=1 // pred_region
      _
    $region41: #{tpu_custom_call.1} parent=1 // pred_fallthru
      _
    // Predicated region
    $region42: #{tpu_custom_call.1} parent=1 // pred_check
      _
    $region43: #{tpu_custom_call.1} parent=1 // pred_check_branch
      %41 = sbr.rel (0) target = $region45
    $region44: #{tpu_custom_call.1} parent=1 // pred_region
      _
    $region45: #{tpu_custom_call.1} parent=1 // pred_fallthru
      _
    // Predicated region
    $region46: #{tpu_custom_call.1} parent=1 // pred_check
      _
    $region47: #{tpu_custom_call.1} parent=1 // pred_check_branch
      %43 = sbr.rel (0) target = $region49
    $region48: #{tpu_custom_call.1} parent=1 // pred_region
      _
    $region49: #{tpu_custom_call.1} parent=1 // pred_fallthru
      _
    // Predicated region
    $region50: #{tpu_custom_call.1} parent=1 // pred_check
      _
    $region51: #{tpu_custom_call.1} parent=1 // pred_check_branch
      %45 = sbr.rel (0) target = $region53
    $region52: #{tpu_custom_call.1} parent=1 // pred_region
      _
    $region53: #{tpu_custom_call.1} parent=1 // pred_fallthru
      _
    // Predicated region
    $region54: #{tpu_custom_call.1} parent=1 // pred_check
      _
    $region55: #{tpu_custom_call.1} parent=1 // pred_check_branch
      %47 = sbr.rel (0) target = $region57
    $region56: #{tpu_custom_call.1} parent=1 // pred_region
      _
    $region57: #{tpu_custom_call.1} parent=1 // pred_fallthru
      _
    %v49 = vld [vmem:[%s0] sm:$0xff]
    %v50 = vld [vmem:[%s0 + $0x8] sm:$0xff]
    %v52 = vcombine.high %v50, %v50
    %53 = vrot.lane.b32.xlu0 %v52, 17
    %v54 = vpop.permute.xlu0 %53
    %v57 = vcombine.high %v49, %v49
    %58 = vrot.lane.b32.xlu0 %v49, 17
    %v59 = vpop.permute.xlu0 %58
    %60 = vrot.lane.b32.xlu0 %v57, 17
    %v61 = vpop.permute.xlu0 %60
    %62 = vrot.lane.b32.xlu0 %v50, 17
    %v63 = vpop.permute.xlu0 %62
    %vm64 = vcmask 138240
    %v65 = vsel %vm64, %v59, %v61
    %v66 = vsel %vm64, %v61, %v63
    %v67 = vsel %vm64, %v63, %v54
    %v72 = vsel %vm64, %v54, %v59
    %v73 = vld [vmem:[%s1] ss:$8 sm:$0xf]
    %v75 = vlaneseq
    %v76 = vshrl.u32 %v75, 7
    %v77 = vsub.s32 0, %v76
    %v78 = vrot.slane %v73, %v77
    %v79 = vlaneseq
    %v80 = vshrl.u32 %v79, 7
    %v81 = vsub.s32 1, %v80
    %v82 = vrot.slane %v73, %v81
    %v83 = vlaneseq
    %v84 = vshrl.u32 %v83, 7
    %v85 = vsub.s32 2, %v84
    %v86 = vrot.slane %v73, %v85
    %v87 = vlaneseq
    %v88 = vshrl.u32 %v87, 7
    %v89 = vsub.s32 3, %v88
    %v90 = vrot.slane %v73, %v89
    %v95 = vmul.f32 %v72, %v78
    %v96 = vmul.f32 %v65, %v82
    %v97 = vmul.f32 %v66, %v86
    %v98 = vmul.f32 %v67, %v90
    %v99 = vmul.f32 %v95, 0.07511362
    %v100 = vmul.f32 %v96, 0.07511362
    %v101 = vmul.f32 %v97, 0.07511362
    %v102 = vmul.f32 %v98, 0.07511362
    %103 = vrot.lane.b32.xlu0 %v52, 16
    %v104 = vpop.permute.xlu0 %103
    %106 = vrot.lane.b32.xlu0 %v49, 16
    %v107 = vpop.permute.xlu0 %106
    %108 = vrot.lane.b32.xlu0 %v57, 16
    %v109 = vpop.permute.xlu0 %108
    %110 = vrot.lane.b32.xlu0 %v50, 16
    %v111 = vpop.permute.xlu0 %110
    %vm112 = vcmask 130048
    %v113 = vsel %vm112, %v107, %v109
    %v114 = vsel %vm112, %v109, %v111
    %v115 = vsel %vm112, %v111, %v104
    %v120 = vsel %vm112, %v104, %v107
    %s121 = scalar_lea.vmem %s1, 1
    %v122 = vld [vmem:[%s121] ss:$8 sm:$0xf]
    %v124 = vlaneseq
    %v125 = vshrl.u32 %v124, 7
    %v126 = vsub.s32 0, %v125
    %v127 = vrot.slane %v122, %v126
    %v128 = vlaneseq
    %v129 = vshrl.u32 %v128, 7
    %v130 = vsub.s32 1, %v129
    %v131 = vrot.slane %v122, %v130
    %v132 = vlaneseq
    %v133 = vshrl.u32 %v132, 7
    %v134 = vsub.s32 2, %v133
    %v135 = vrot.slane %v122, %v134
    %v136 = vlaneseq
    %v137 = vshrl.u32 %v136, 7
    %v138 = vsub.s32 3, %v137
    %v139 = vrot.slane %v122, %v138
    %v144 = vmul.f32 %v120, %v127
    %v145 = vmul.f32 %v113, %v131
    %v146 = vmul.f32 %v114, %v135
    %v147 = vmul.f32 %v115, %v139
    %v148 = vmul.f32 %v144, 0.12384141
    %v149 = vmul.f32 %v145, 0.12384141
    %v150 = vmul.f32 %v146, 0.12384141
    %v151 = vmul.f32 %v147, 0.12384141
    %v152 = vadd.f32 %v99, %v148
    %v153 = vadd.f32 %v100, %v149
    %v154 = vadd.f32 %v101, %v150
    %v155 = vadd.f32 %v102, %v151
    %156 = vrot.lane.b32.xlu0 %v52, 15
    %v157 = vpop.permute.xlu0 %156
    %159 = vrot.lane.b32.xlu0 %v49, 15
    %v160 = vpop.permute.xlu0 %159
    %161 = vrot.lane.b32.xlu0 %v57, 15
    %v162 = vpop.permute.xlu0 %161
    %163 = vrot.lane.b32.xlu0 %v50, 15
    %v164 = vpop.permute.xlu0 %163
    %vm165 = vcmask 121856
    %v166 = vsel %vm165, %v160, %v162
    %v167 = vsel %vm165, %v162, %v164
    %v168 = vsel %vm165, %v164, %v157
    %v173 = vsel %vm165, %v157, %v160
    %s174 = scalar_lea.vmem %s1, 2
    %v175 = vld [vmem:[%s174] ss:$8 sm:$0xf]
    %v177 = vlaneseq
    %v178 = vshrl.u32 %v177, 7
    %v179 = vsub.s32 0, %v178
    %v180 = vrot.slane %v175, %v179
    %v181 = vlaneseq
    %v182 = vshrl.u32 %v181, 7
    %v183 = vsub.s32 1, %v182
    %v184 = vrot.slane %v175, %v183
    %v185 = vlaneseq
    %v186 = vshrl.u32 %v185, 7
    %v187 = vsub.s32 2, %v186
    %v188 = vrot.slane %v175, %v187
    %v189 = vlaneseq
    %v190 = vshrl.u32 %v189, 7
    %v191 = vsub.s32 3, %v190
    %v192 = vrot.slane %v175, %v191
    %v197 = vmul.f32 %v173, %v180
    %v198 = vmul.f32 %v166, %v184
    %v199 = vmul.f32 %v167, %v188
    %v200 = vmul.f32 %v168, %v192
    %v201 = vmul.f32 %v197, 0.07511362
    %v202 = vmul.f32 %v198, 0.07511362
    %v203 = vmul.f32 %v199, 0.07511362
    %v204 = vmul.f32 %v200, 0.07511362
    %v205 = vadd.f32 %v152, %v201
    %v206 = vadd.f32 %v153, %v202
    %v207 = vadd.f32 %v154, %v203
    %v208 = vadd.f32 %v155, %v204
    %209 = vrot.lane.b32.xlu0 %v52, 1
    %v210 = vpop.permute.xlu0 %209
    %212 = vrot.lane.b32.xlu0 %v49, 1
    %v213 = vpop.permute.xlu0 %212
    %214 = vrot.lane.b32.xlu0 %v57, 1
    %v215 = vpop.permute.xlu0 %214
    %216 = vrot.lane.b32.xlu0 %v50, 1
    %v217 = vpop.permute.xlu0 %216
    %vm218 = vcmask 7168
    %v219 = vsel %vm218, %v213, %v215
    %v220 = vsel %vm218, %v215, %v217
    %v221 = vsel %vm218, %v217, %v210
    %v226 = vsel %vm218, %v210, %v213
    %s227 = scalar_lea.vmem %s1, 3
    %v228 = vld [vmem:[%s227] ss:$8 sm:$0xf]
    %v230 = vlaneseq
    %v231 = vshrl.u32 %v230, 7
    %v232 = vsub.s32 0, %v231
    %v233 = vrot.slane %v228, %v232
    %v234 = vlaneseq
    %v235 = vshrl.u32 %v234, 7
    %v236 = vsub.s32 1, %v235
    %v237 = vrot.slane %v228, %v236
    %v238 = vlaneseq
    %v239 = vshrl.u32 %v238, 7
    %v240 = vsub.s32 2, %v239
    %v241 = vrot.slane %v228, %v240
    %v242 = vlaneseq
    %v243 = vshrl.u32 %v242, 7
    %v244 = vsub.s32 3, %v243
    %v245 = vrot.slane %v228, %v244
    %v250 = vmul.f32 %v226, %v233
    %v251 = vmul.f32 %v219, %v237
    %v252 = vmul.f32 %v220, %v241
    %v253 = vmul.f32 %v221, %v245
    %v254 = vmul.f32 %v250, 0.12384141
    %v255 = vmul.f32 %v251, 0.12384141
    %v256 = vmul.f32 %v252, 0.12384141
    %v257 = vmul.f32 %v253, 0.12384141
    %v258 = vadd.f32 %v205, %v254
    %v259 = vadd.f32 %v206, %v255
    %v260 = vadd.f32 %v207, %v256
    %v261 = vadd.f32 %v208, %v257
    %v262 = vmul.f32 %v49, 0.20417996
    %v263 = vmul.f32 %v50, 0.20417996
    %v266 = vcombine.high %v262, %v262
    %v267 = vcombine.high %v263, %v263
    %v270 = vadd.f32 %v258, %v262
    %v271 = vadd.f32 %v259, %v266
    %v272 = vadd.f32 %v260, %v263
    %v273 = vadd.f32 %v261, %v267
    %274 = vrot.lane.b32.xlu0 %v49, 127
    %v275 = vpop.permute.xlu0 %274
    %276 = vrot.lane.b32.xlu0 %v57, 127
    %v277 = vpop.permute.xlu0 %276
    %278 = vrot.lane.b32.xlu0 %v50, 127
    %v279 = vpop.permute.xlu0 %278
    %280 = vrot.lane.b32.xlu0 %v52, 127
    %v281 = vpop.permute.xlu0 %280
    %vm282 = vcmask 1039360
    %v283 = vsel %vm282, %v275, %v277
    %v284 = vsel %vm282, %v277, %v279
    %v285 = vsel %vm282, %v279, %v281
    %v291 = vsel %vm282, %v281, %v275
    %s292 = scalar_lea.vmem %s1, 5
    %v293 = vld [vmem:[%s292] ss:$8 sm:$0xf]
    %v295 = vlaneseq
    %v296 = vshrl.u32 %v295, 7
    %v297 = vsub.s32 0, %v296
    %v298 = vrot.slane %v293, %v297
    %v299 = vlaneseq
    %v300 = vshrl.u32 %v299, 7
    %v301 = vsub.s32 1, %v300
    %v302 = vrot.slane %v293, %v301
    %v303 = vlaneseq
    %v304 = vshrl.u32 %v303, 7
    %v305 = vsub.s32 2, %v304
    %v306 = vrot.slane %v293, %v305
    %v307 = vlaneseq
    %v308 = vshrl.u32 %v307, 7
    %v309 = vsub.s32 3, %v308
    %v310 = vrot.slane %v293, %v309
    %v315 = vmul.f32 %v283, %v298
    %v316 = vmul.f32 %v284, %v302
    %v317 = vmul.f32 %v285, %v306
    %v318 = vmul.f32 %v291, %v310
    %v319 = vmul.f32 %v315, 0.12384141
    %v320 = vmul.f32 %v316, 0.12384141
    %v321 = vmul.f32 %v317, 0.12384141
    %v322 = vmul.f32 %v318, 0.12384141
    %v323 = vadd.f32 %v270, %v319
    %v324 = vadd.f32 %v271, %v320
    %v325 = vadd.f32 %v272, %v321
    %v326 = vadd.f32 %v273, %v322
    %327 = vrot.lane.b32.xlu0 %v49, 113
    %v328 = vpop.permute.xlu0 %327
    %329 = vrot.lane.b32.xlu0 %v57, 113
    %v330 = vpop.permute.xlu0 %329
    %331 = vrot.lane.b32.xlu0 %v50, 113
    %v332 = vpop.permute.xlu0 %331
    %333 = vrot.lane.b32.xlu0 %v52, 113
    %v334 = vpop.permute.xlu0 %333
    %vm335 = vcmask 924672
    %v336 = vsel %vm335, %v328, %v330
    %v337 = vsel %vm335, %v330, %v332
    %v338 = vsel %vm335, %v332, %v334
    %v344 = vsel %vm335, %v334, %v328
    %s345 = scalar_lea.vmem %s1, 6
    %v346 = vld [vmem:[%s345] ss:$8 sm:$0xf]
    %v348 = vlaneseq
    %v349 = vshrl.u32 %v348, 7
    %v350 = vsub.s32 0, %v349
    %v351 = vrot.slane %v346, %v350
    %v352 = vlaneseq
    %v353 = vshrl.u32 %v352, 7
    %v354 = vsub.s32 1, %v353
    %v355 = vrot.slane %v346, %v354
    %v356 = vlaneseq
    %v357 = vshrl.u32 %v356, 7
    %v358 = vsub.s32 2, %v357
    %v359 = vrot.slane %v346, %v358
    %v360 = vlaneseq
    %v361 = vshrl.u32 %v360, 7
    %v362 = vsub.s32 3, %v361
    %v363 = vrot.slane %v346, %v362
    %v368 = vmul.f32 %v336, %v351
    %v369 = vmul.f32 %v337, %v355
    %v370 = vmul.f32 %v338, %v359
    %v371 = vmul.f32 %v344, %v363
    %v372 = vmul.f32 %v368, 0.07511362
    %v373 = vmul.f32 %v369, 0.07511362
    %v374 = vmul.f32 %v370, 0.07511362
    %v375 = vmul.f32 %v371, 0.07511362
    %v376 = vadd.f32 %v323, %v372
    %v377 = vadd.f32 %v324, %v373
    %v378 = vadd.f32 %v325, %v374
    %v379 = vadd.f32 %v326, %v375
    %380 = vrot.lane.b32.xlu0 %v49, 112
    %v381 = vpop.permute.xlu0 %380
    %382 = vrot.lane.b32.xlu0 %v57, 112
    %v383 = vpop.permute.xlu0 %382
    %384 = vrot.lane.b32.xlu0 %v50, 112
    %v385 = vpop.permute.xlu0 %384
    %386 = vrot.lane.b32.xlu0 %v52, 112
    %v387 = vpop.permute.xlu0 %386
    %vm388 = vcmask 916480
    %v389 = vsel %vm388, %v381, %v383
    %v390 = vsel %vm388, %v383, %v385
    %v391 = vsel %vm388, %v385, %v387
    %v397 = vsel %vm388, %v387, %v381
    %s398 = scalar_lea.vmem %s1, 7
    %v399 = vld [vmem:[%s398] ss:$8 sm:$0xf]
    %v401 = vlaneseq
    %v402 = vshrl.u32 %v401, 7
    %v403 = vsub.s32 0, %v402
    %v404 = vrot.slane %v399, %v403
    %v405 = vlaneseq
    %v406 = vshrl.u32 %v405, 7
    %v407 = vsub.s32 1, %v406
    %v408 = vrot.slane %v399, %v407
    %v409 = vlaneseq
    %v410 = vshrl.u32 %v409, 7
    %v411 = vsub.s32 2, %v410
    %v412 = vrot.slane %v399, %v411
    %v413 = vlaneseq
    %v414 = vshrl.u32 %v413, 7
    %v415 = vsub.s32 3, %v414
    %v416 = vrot.slane %v399, %v415
    %v421 = vmul.f32 %v389, %v404
    %v422 = vmul.f32 %v390, %v408
    %v423 = vmul.f32 %v391, %v412
    %v424 = vmul.f32 %v397, %v416
    %v425 = vmul.f32 %v421, 0.12384141
    %v426 = vmul.f32 %v422, 0.12384141
    %v427 = vmul.f32 %v423, 0.12384141
    %v428 = vmul.f32 %v424, 0.12384141
    %v429 = vadd.f32 %v376, %v425
    %v430 = vadd.f32 %v377, %v426
    %v431 = vadd.f32 %v378, %v427
    %v432 = vadd.f32 %v379, %v428
    %433 = vrot.lane.b32.xlu0 %v49, 111
    %v434 = vpop.permute.xlu0 %433
    %435 = vrot.lane.b32.xlu0 %v57, 111
    %v436 = vpop.permute.xlu0 %435
    %437 = vrot.lane.b32.xlu0 %v50, 111
    %v438 = vpop.permute.xlu0 %437
    %439 = vrot.lane.b32.xlu0 %v52, 111
    %v440 = vpop.permute.xlu0 %439
    %vm441 = vcmask 908288
    %v442 = vsel %vm441, %v434, %v436
    %v443 = vsel %vm441, %v436, %v438
    %v444 = vsel %vm441, %v438, %v440
    %v450 = vsel %vm441, %v440, %v434
    %s451 = scalar_lea.vmem %s1, 32
    %v452 = vld [vmem:[%s451] ss:$8 sm:$0xf]
    %v454 = vlaneseq
    %v455 = vshrl.u32 %v454, 7
    %v456 = vsub.s32 0, %v455
    %v457 = vrot.slane %v452, %v456
    %v458 = vlaneseq
    %v459 = vshrl.u32 %v458, 7
    %v460 = vsub.s32 1, %v459
    %v461 = vrot.slane %v452, %v460
    %v462 = vlaneseq
    %v463 = vshrl.u32 %v462, 7
    %v464 = vsub.s32 2, %v463
    %v465 = vrot.slane %v452, %v464
    %v466 = vlaneseq
    %v467 = vshrl.u32 %v466, 7
    %v468 = vsub.s32 3, %v467
    %v469 = vrot.slane %v452, %v468
    %v474 = vmul.f32 %v442, %v457
    %v475 = vmul.f32 %v443, %v461
    %v476 = vmul.f32 %v444, %v465
    %v477 = vmul.f32 %v450, %v469
    %v478 = vmul.f32 %v474, 0.07511362
    %v479 = vmul.f32 %v475, 0.07511362
    %v480 = vmul.f32 %v476, 0.07511362
    %v481 = vmul.f32 %v477, 0.07511362
    %v482 = vadd.f32 %v429, %v478
    %v483 = vadd.f32 %v430, %v479
    %v484 = vadd.f32 %v431, %v480
    %v485 = vadd.f32 %v432, %v481
    %v486 = vld [vmem:[%s3] sm:$0xf]
    %488 = vset.pattern.permute.xlu0 0
    %489 = vperm.xlu0 %488, %v486
    %v490 = vpop.permute.xlu0 %489
    %v492 = vmul.f32 %v482, %v490
    %v493 = vmul.f32 %v483, %v490
    %v494 = vmul.f32 %v484, %v490
    %v495 = vmul.f32 %v485, %v490
    %v496 = vld [vmem:[%s4] sm:$0xf]
    %498 = vset.pattern.permute.xlu0 0
    %499 = vperm.xlu0 %498, %v496
    %v500 = vpop.permute.xlu0 %499
    %v502 = vadd.f32 %v492, %v500
    %v503 = vadd.f32 %v493, %v500
    %v504 = vadd.f32 %v494, %v500
    %v505 = vadd.f32 %v495, %v500
    %v506 = vmax.f32 %v502, 0.0
    %v507 = vmax.f32 %v503, 0.0
    %v508 = vmax.f32 %v504, 0.0
    %v509 = vmax.f32 %v505, 0.0
    %v514 = vcombine.low %v506, %v507
    %v515 = vcombine.low %v508, %v509
    %v518 = vadd.f32 %v49, %v514
    %v519 = vadd.f32 %v50, %v515
    %v520 = vld [vmem:[%s5] sm:$0xff]
    %v521 = vld [vmem:[%s5 + $0x8] sm:$0xff]
    %v522 = vld [vmem:[%s5 + $0x10] sm:$0xff]
    %v523 = vld [vmem:[%s5 + $0x18] sm:$0xff]
    %v524 = vld [vmem:[%s5 + $0x20] sm:$0xff]
    %v525 = vld [vmem:[%s5 + $0x28] sm:$0xff]
    %v526 = vld [vmem:[%s5 + $0x30] sm:$0xff]
    %v527 = vld [vmem:[%s5 + $0x38] sm:$0xff]
    %v530 = vcombine.high %v518, %v518
    %v531 = vcombine.high %v519, %v519
    %vm532 = vcmask 31744
    %v534 = vsel %vm532, %v520, 0
    %v537 = vsel %vm532, %v521, 0
    %v540 = vsel %vm532, %v522, 0
    %v543 = vsel %vm532, %v523, 0
    %v546 = vsel %vm532, %v524, 0
    %v549 = vsel %vm532, %v525, 0
    %v552 = vsel %vm532, %v526, 0
    %v555 = vsel %vm532, %v527, 0
    %vm557 = vcmask 1043456
    %v558 = vsel %vm557, %v518, 0
    %v560 = vsel %vm557, %v530, 0
    %v562 = vsel %vm557, %v519, 0
    %v564 = vsel %vm557, %v531, 0
    %566 = vmatprep.subr.mxu0 0.0
    %567 = vmatpush1.msra.mxu0 0.0
    %568 = vmatprep.subr.mxu0 0.0
    %569 = vmatpush1.msra.mxu0 0.0
    %570 = vmatprep.subr.mxu0 0.0
    %571 = vmatpush1.msra.mxu0 0.0
    %572 = vmatprep.subr.mxu0 0.0
    %573 = vmatpush1.msra.mxu0 0.0
    %574 = vmatprep.subr.mxu0 0.0
    %575 = vmatpush1.msra.mxu0 0.0
    %576 = vmatprep.subr.mxu0 0.0
    %577 = vmatpush1.msra.mxu0 0.0
    %578 = vmatprep.subr.mxu0 0.0
    %579 = vmatpush1.msra.mxu0 0.0
    %580 = vmatprep.subr.mxu0 0.0
    %581 = vmatpush1.msra.mxu0 0.0
    %582 = vmatprep.subr.mxu0 0.0
    %583 = vmatpush1.msra.mxu0 0.0
    %584 = vmatprep.subr.mxu0 0.0
    %585 = vmatpush1.msra.mxu0 0.0
    %586 = vmatprep.subr.mxu0 0.0
    %587 = vmatpush1.msra.mxu0 0.0
    %588 = vmatprep.subr.mxu0 0.0
    %589 = vmatpush1.msra.mxu0 0.0
    %590 = vmatprep.subr.mxu0 0.0
    %591 = vmatpush1.msra.mxu0 0.0
    %592 = vmatprep.subr.mxu0 0.0
    %593 = vmatpush1.msra.mxu0 0.0
    %594 = vmatprep.subr.mxu0 0.0
    %595 = vmatpush1.msra.mxu0 0.0
    %596 = vmatprep.subr.mxu0 %v560
    %597 = vmatpush1.msra.mxu0 %v558
    %598 = vmatprep.subr.mxu0 0.0
    %599 = vmatpush2.msra.mxu0 0.0
    %600 = vmatprep.subr.mxu0 0.0
    %601 = vmatpush2.msra.mxu0 0.0
    %602 = vmatprep.subr.mxu0 0.0
    %603 = vmatpush2.msra.mxu0 0.0
    %604 = vmatprep.subr.mxu0 0.0
    %605 = vmatpush2.msra.mxu0 0.0
    %606 = vmatprep.subr.mxu0 0.0
    %607 = vmatpush2.msra.mxu0 0.0
    %608 = vmatprep.subr.mxu0 0.0
    %609 = vmatpush2.msra.mxu0 0.0
    %610 = vmatprep.subr.mxu0 0.0
    %611 = vmatpush2.msra.mxu0 0.0
    %612 = vmatprep.subr.mxu0 0.0
    %613 = vmatpush2.msra.mxu0 0.0
    %614 = vmatprep.subr.mxu0 0.0
    %615 = vmatpush2.msra.mxu0 0.0
    %616 = vmatprep.subr.mxu0 0.0
    %617 = vmatpush2.msra.mxu0 0.0
    %618 = vmatprep.subr.mxu0 0.0
    %619 = vmatpush2.msra.mxu0 0.0
    %620 = vmatprep.subr.mxu0 0.0
    %621 = vmatpush2.msra.mxu0 0.0
    %622 = vmatprep.subr.mxu0 0.0
    %623 = vmatpush2.msra.mxu0 0.0
    %624 = vmatprep.subr.mxu0 0.0
    %625 = vmatpush2.msra.mxu0 0.0
    %626 = vmatprep.subr.mxu0 0.0
    %627 = vmatpush2.msra.mxu0 0.0
    %628 = vmatprep.subr.mxu0 0.0
    %629 = vmatpush2.msra.mxu0 0.0
    %630 = vmatprep.mubr.f32.mxu0 0.0
    %631 = vmatmul.mubr.f32.gmra.mxu0 %v534
    %v632 = vpop.f32.mrf.mxu0
    %v633 = vadd.f32 0.0, %v632
    %v634 = vpop.f32.mrf.mxu0
    %v635 = vadd.f32 0.0, %v634
    %636 = vmatprep.mubr.f32.mxu0 0.0
    %637 = vmatmul.mubr.f32.gmra.mxu0 %v537
    %v638 = vpop.f32.mrf.mxu0
    %v639 = vadd.f32 0.0, %v638
    %v640 = vpop.f32.mrf.mxu0
    %v641 = vadd.f32 0.0, %v640
    %642 = vmatprep.mubr.f32.mxu0 0.0
    %643 = vmatmul.mubr.f32.gmra.mxu0 %v540
    %v644 = vpop.f32.mrf.mxu0
    %v645 = vadd.f32 0.0, %v644
    %v646 = vpop.f32.mrf.mxu0
    %v647 = vadd.f32 0.0, %v646
    %648 = vmatprep.mubr.f32.mxu0 0.0
    %649 = vmatmul.mubr.f32.gmra.mxu0 %v543
    %v650 = vpop.f32.mrf.mxu0
    %v651 = vadd.f32 0.0, %v650
    %v652 = vpop.f32.mrf.mxu0
    %v653 = vadd.f32 0.0, %v652
    %654 = vmatprep.mubr.f32.mxu0 0.0
    %655 = vmatmul.mubr.f32.gmra.mxu0 %v546
    %v656 = vpop.f32.mrf.mxu0
    %v657 = vadd.f32 0.0, %v656
    %v658 = vpop.f32.mrf.mxu0
    %v659 = vadd.f32 0.0, %v658
    %660 = vmatprep.mubr.f32.mxu0 0.0
    %661 = vmatmul.mubr.f32.gmra.mxu0 %v549
    %v662 = vpop.f32.mrf.mxu0
    %v663 = vadd.f32 0.0, %v662
    %v664 = vpop.f32.mrf.mxu0
    %v665 = vadd.f32 0.0, %v664
    %666 = vmatprep.mubr.f32.mxu0 0.0
    %667 = vmatmul.mubr.f32.gmra.mxu0 %v552
    %v668 = vpop.f32.mrf.mxu0
    %v669 = vadd.f32 0.0, %v668
    %v670 = vpop.f32.mrf.mxu0
    %v671 = vadd.f32 0.0, %v670
    %672 = vmatprep.mubr.f32.mxu0 0.0
    %673 = vmatmul.mubr.f32.gmra.mxu0 %v555
    %v674 = vpop.f32.mrf.mxu0
    %v675 = vadd.f32 0.0, %v674
    %v676 = vpop.f32.mrf.mxu0
    %v677 = vadd.f32 0.0, %v676
    %678 = vdwg.mxu0
    %679 = vmatprep.subr.mxu0 0.0
    %680 = vmatpush1.msra.mxu0 0.0
    %681 = vmatprep.subr.mxu0 0.0
    %682 = vmatpush1.msra.mxu0 0.0
    %683 = vmatprep.subr.mxu0 0.0
    %684 = vmatpush1.msra.mxu0 0.0
    %685 = vmatprep.subr.mxu0 0.0
    %686 = vmatpush1.msra.mxu0 0.0
    %687 = vmatprep.subr.mxu0 0.0
    %688 = vmatpush1.msra.mxu0 0.0
    %689 = vmatprep.subr.mxu0 0.0
    %690 = vmatpush1.msra.mxu0 0.0
    %691 = vmatprep.subr.mxu0 0.0
    %692 = vmatpush1.msra.mxu0 0.0
    %693 = vmatprep.subr.mxu0 0.0
    %694 = vmatpush1.msra.mxu0 0.0
    %695 = vmatprep.subr.mxu0 0.0
    %696 = vmatpush1.msra.mxu0 0.0
    %697 = vmatprep.subr.mxu0 0.0
    %698 = vmatpush1.msra.mxu0 0.0
    %699 = vmatprep.subr.mxu0 0.0
    %700 = vmatpush1.msra.mxu0 0.0
    %701 = vmatprep.subr.mxu0 0.0
    %702 = vmatpush1.msra.mxu0 0.0
    %703 = vmatprep.subr.mxu0 0.0
    %704 = vmatpush1.msra.mxu0 0.0
    %705 = vmatprep.subr.mxu0 0.0
    %706 = vmatpush1.msra.mxu0 0.0
    %707 = vmatprep.subr.mxu0 0.0
    %708 = vmatpush1.msra.mxu0 0.0
    %709 = vmatprep.subr.mxu0 %v564
    %710 = vmatpush1.msra.mxu0 %v562
    %711 = vmatprep.subr.mxu0 0.0
    %712 = vmatpush2.msra.mxu0 0.0
    %713 = vmatprep.subr.mxu0 0.0
    %714 = vmatpush2.msra.mxu0 0.0
    %715 = vmatprep.subr.mxu0 0.0
    %716 = vmatpush2.msra.mxu0 0.0
    %717 = vmatprep.subr.mxu0 0.0
    %718 = vmatpush2.msra.mxu0 0.0
    %719 = vmatprep.subr.mxu0 0.0
    %720 = vmatpush2.msra.mxu0 0.0
    %721 = vmatprep.subr.mxu0 0.0
    %722 = vmatpush2.msra.mxu0 0.0
    %723 = vmatprep.subr.mxu0 0.0
    %724 = vmatpush2.msra.mxu0 0.0
    %725 = vmatprep.subr.mxu0 0.0
    %726 = vmatpush2.msra.mxu0 0.0
    %727 = vmatprep.subr.mxu0 0.0
    %728 = vmatpush2.msra.mxu0 0.0
    %729 = vmatprep.subr.mxu0 0.0
    %730 = vmatpush2.msra.mxu0 0.0
    %731 = vmatprep.subr.mxu0 0.0
    %732 = vmatpush2.msra.mxu0 0.0
    %733 = vmatprep.subr.mxu0 0.0
    %734 = vmatpush2.msra.mxu0 0.0
    %735 = vmatprep.subr.mxu0 0.0
    %736 = vmatpush2.msra.mxu0 0.0
    %737 = vmatprep.subr.mxu0 0.0
    %738 = vmatpush2.msra.mxu0 0.0
    %739 = vmatprep.subr.mxu0 0.0
    %740 = vmatpush2.msra.mxu0 0.0
    %741 = vmatprep.subr.mxu0 0.0
    %742 = vmatpush2.msra.mxu0 0.0
    %743 = vmatprep.mubr.f32.mxu0 0.0
    %744 = vmatmul.mubr.f32.gmra.mxu0 %v534
    %v745 = vpop.f32.mrf.mxu0
    %v746 = vadd.f32 0.0, %v745
    %v747 = vpop.f32.mrf.mxu0
    %v748 = vadd.f32 0.0, %v747
    %749 = vmatprep.mubr.f32.mxu0 0.0
    %750 = vmatmul.mubr.f32.gmra.mxu0 %v537
    %v751 = vpop.f32.mrf.mxu0
    %v752 = vadd.f32 0.0, %v751
    %v753 = vpop.f32.mrf.mxu0
    %v754 = vadd.f32 0.0, %v753
    %755 = vmatprep.mubr.f32.mxu0 0.0
    %756 = vmatmul.mubr.f32.gmra.mxu0 %v540
    %v757 = vpop.f32.mrf.mxu0
    %v758 = vadd.f32 0.0, %v757
    %v759 = vpop.f32.mrf.mxu0
    %v760 = vadd.f32 0.0, %v759
    %761 = vmatprep.mubr.f32.mxu0 0.0
    %762 = vmatmul.mubr.f32.gmra.mxu0 %v543
    %v763 = vpop.f32.mrf.mxu0
    %v764 = vadd.f32 0.0, %v763
    %v765 = vpop.f32.mrf.mxu0
    %v766 = vadd.f32 0.0, %v765
    %767 = vmatprep.mubr.f32.mxu0 0.0
    %768 = vmatmul.mubr.f32.gmra.mxu0 %v546
    %v769 = vpop.f32.mrf.mxu0
    %v770 = vadd.f32 0.0, %v769
    %v771 = vpop.f32.mrf.mxu0
    %v772 = vadd.f32 0.0, %v771
    %773 = vmatprep.mubr.f32.mxu0 0.0
    %774 = vmatmul.mubr.f32.gmra.mxu0 %v549
    %v775 = vpop.f32.mrf.mxu0
    %v776 = vadd.f32 0.0, %v775
    %v777 = vpop.f32.mrf.mxu0
    %v778 = vadd.f32 0.0, %v777
    %779 = vmatprep.mubr.f32.mxu0 0.0
    %780 = vmatmul.mubr.f32.gmra.mxu0 %v552
    %v781 = vpop.f32.mrf.mxu0
    %v782 = vadd.f32 0.0, %v781
    %v783 = vpop.f32.mrf.mxu0
    %v784 = vadd.f32 0.0, %v783
    %785 = vmatprep.mubr.f32.mxu0 0.0
    %786 = vmatmul.mubr.f32.gmra.mxu0 %v555
    %v787 = vpop.f32.mrf.mxu0
    %v788 = vadd.f32 0.0, %v787
    %v789 = vpop.f32.mrf.mxu0
    %v790 = vadd.f32 0.0, %v789
    %791 = vdwg.mxu0
    %v792 = vld [vmem:[%s6] sm:$0xff]
    %v793 = vld [vmem:[%s6 + $0x8] sm:$0xff]
    %v794 = vld [vmem:[%s6 + $0x10] sm:$0xff]
    %v795 = vld [vmem:[%s6 + $0x18] sm:$0xff]
    %v796 = vld [vmem:[%s6 + $0x20] sm:$0xff]
    %v797 = vld [vmem:[%s6 + $0x28] sm:$0xff]
    %v798 = vld [vmem:[%s6 + $0x30] sm:$0xff]
    %v799 = vld [vmem:[%s6 + $0x38] sm:$0xff]
    %801 = vset.pattern.permute.xlu0 0
    %802 = vperm.xlu0 %801, %v792
    %v803 = vpop.permute.xlu0 %802
    %806 = vset.pattern.permute.xlu0 0
    %807 = vperm.xlu0 %806, %v793
    %v808 = vpop.permute.xlu0 %807
    %811 = vset.pattern.permute.xlu0 0
    %812 = vperm.xlu0 %811, %v794
    %v813 = vpop.permute.xlu0 %812
    %816 = vset.pattern.permute.xlu0 0
    %817 = vperm.xlu0 %816, %v795
    %v818 = vpop.permute.xlu0 %817
    %821 = vset.pattern.permute.xlu0 0
    %822 = vperm.xlu0 %821, %v796
    %v823 = vpop.permute.xlu0 %822
    %826 = vset.pattern.permute.xlu0 0
    %827 = vperm.xlu0 %826, %v797
    %v828 = vpop.permute.xlu0 %827
    %831 = vset.pattern.permute.xlu0 0
    %832 = vperm.xlu0 %831, %v798
    %v833 = vpop.permute.xlu0 %832
    %836 = vset.pattern.permute.xlu0 0
    %837 = vperm.xlu0 %836, %v799
    %v838 = vpop.permute.xlu0 %837
    %v840 = vmul.f32 %v633, %v803
    %v841 = vmul.f32 %v635, %v803
    %v842 = vmul.f32 %v746, %v803
    %v843 = vmul.f32 %v748, %v803
    %v844 = vmul.f32 %v639, %v808
    %v845 = vmul.f32 %v641, %v808
    %v846 = vmul.f32 %v752, %v808
    %v847 = vmul.f32 %v754, %v808
    %v848 = vmul.f32 %v645, %v813
    %v849 = vmul.f32 %v647, %v813
    %v850 = vmul.f32 %v758, %v813
    %v851 = vmul.f32 %v760, %v813
    %v852 = vmul.f32 %v651, %v818
    %v853 = vmul.f32 %v653, %v818
    %v854 = vmul.f32 %v764, %v818
    %v855 = vmul.f32 %v766, %v818
    %v856 = vmul.f32 %v657, %v823
    %v857 = vmul.f32 %v659, %v823
    %v858 = vmul.f32 %v770, %v823
    %v859 = vmul.f32 %v772, %v823
    %v860 = vmul.f32 %v663, %v828
    %v861 = vmul.f32 %v665, %v828
    %v862 = vmul.f32 %v776, %v828
    %v863 = vmul.f32 %v778, %v828
    %v864 = vmul.f32 %v669, %v833
    %v865 = vmul.f32 %v671, %v833
    %v866 = vmul.f32 %v782, %v833
    %v867 = vmul.f32 %v784, %v833
    %v868 = vmul.f32 %v675, %v838
    %v869 = vmul.f32 %v677, %v838
    %v870 = vmul.f32 %v788, %v838
    %v871 = vmul.f32 %v790, %v838
    %v872 = vld [vmem:[%s7] sm:$0xff]
    %v873 = vld [vmem:[%s7 + $0x8] sm:$0xff]
    %v874 = vld [vmem:[%s7 + $0x10] sm:$0xff]
    %v875 = vld [vmem:[%s7 + $0x18] sm:$0xff]
    %v876 = vld [vmem:[%s7 + $0x20] sm:$0xff]
    %v877 = vld [vmem:[%s7 + $0x28] sm:$0xff]
    %v878 = vld [vmem:[%s7 + $0x30] sm:$0xff]
    %v879 = vld [vmem:[%s7 + $0x38] sm:$0xff]
    %881 = vset.pattern.permute.xlu0 0
    %882 = vperm.xlu0 %881, %v872
    %v883 = vpop.permute.xlu0 %882
    %886 = vset.pattern.permute.xlu0 0
    %887 = vperm.xlu0 %886, %v873
    %v888 = vpop.permute.xlu0 %887
    %891 = vset.pattern.permute.xlu0 0
    %892 = vperm.xlu0 %891, %v874
    %v893 = vpop.permute.xlu0 %892
    %896 = vset.pattern.permute.xlu0 0
    %897 = vperm.xlu0 %896, %v875
    %v898 = vpop.permute.xlu0 %897
    %901 = vset.pattern.permute.xlu0 0
    %902 = vperm.xlu0 %901, %v876
    %v903 = vpop.permute.xlu0 %902
    %906 = vset.pattern.permute.xlu0 0
    %907 = vperm.xlu0 %906, %v877
    %v908 = vpop.permute.xlu0 %907
    %911 = vset.pattern.permute.xlu0 0
    %912 = vperm.xlu0 %911, %v878
    %v913 = vpop.permute.xlu0 %912
    %916 = vset.pattern.permute.xlu0 0
    %917 = vperm.xlu0 %916, %v879
    %v918 = vpop.permute.xlu0 %917
    %v920 = vadd.f32 %v840, %v883
    %v921 = vadd.f32 %v841, %v883
    %v922 = vadd.f32 %v842, %v883
    %v923 = vadd.f32 %v843, %v883
    %v924 = vadd.f32 %v844, %v888
    %v925 = vadd.f32 %v845, %v888
    %v926 = vadd.f32 %v846, %v888
    %v927 = vadd.f32 %v847, %v888
    %v928 = vadd.f32 %v848, %v893
    %v929 = vadd.f32 %v849, %v893
    %v930 = vadd.f32 %v850, %v893
    %v931 = vadd.f32 %v851, %v893
    %v932 = vadd.f32 %v852, %v898
    %v933 = vadd.f32 %v853, %v898
    %v934 = vadd.f32 %v854, %v898
    %v935 = vadd.f32 %v855, %v898
    %v936 = vadd.f32 %v856, %v903
    %v937 = vadd.f32 %v857, %v903
    %v938 = vadd.f32 %v858, %v903
    %v939 = vadd.f32 %v859, %v903
    %v940 = vadd.f32 %v860, %v908
    %v941 = vadd.f32 %v861, %v908
    %v942 = vadd.f32 %v862, %v908
    %v943 = vadd.f32 %v863, %v908
    %v944 = vadd.f32 %v864, %v913
    %v945 = vadd.f32 %v865, %v913
    %v946 = vadd.f32 %v866, %v913
    %v947 = vadd.f32 %v867, %v913
    %v948 = vadd.f32 %v868, %v918
    %v949 = vadd.f32 %v869, %v918
    %v950 = vadd.f32 %v870, %v918
    %v951 = vadd.f32 %v871, %v918
    %v952 = vmax.f32 %v920, 0.0
    %v953 = vmax.f32 %v921, 0.0
    %v954 = vmax.f32 %v922, 0.0
    %v955 = vmax.f32 %v923, 0.0
    %v956 = vmax.f32 %v924, 0.0
    %v957 = vmax.f32 %v925, 0.0
    %v958 = vmax.f32 %v926, 0.0
    %v959 = vmax.f32 %v927, 0.0
    %v960 = vmax.f32 %v928, 0.0
    %v961 = vmax.f32 %v929, 0.0
    %v962 = vmax.f32 %v930, 0.0
    %v963 = vmax.f32 %v931, 0.0
    %v964 = vmax.f32 %v932, 0.0
    %v965 = vmax.f32 %v933, 0.0
    %v966 = vmax.f32 %v934, 0.0
    %v967 = vmax.f32 %v935, 0.0
    %v968 = vmax.f32 %v936, 0.0
    %v969 = vmax.f32 %v937, 0.0
    %v970 = vmax.f32 %v938, 0.0
    %v971 = vmax.f32 %v939, 0.0
    %v972 = vmax.f32 %v940, 0.0
    %v973 = vmax.f32 %v941, 0.0
    %v974 = vmax.f32 %v942, 0.0
    %v975 = vmax.f32 %v943, 0.0
    %v976 = vmax.f32 %v944, 0.0
    %v977 = vmax.f32 %v945, 0.0
    %v978 = vmax.f32 %v946, 0.0
    %v979 = vmax.f32 %v947, 0.0
    %v980 = vmax.f32 %v948, 0.0
    %v981 = vmax.f32 %v949, 0.0
    %v982 = vmax.f32 %v950, 0.0
    %v983 = vmax.f32 %v951, 0.0
    %v984 = vpack.c.bf16 %v956, %v952
    %v985 = vpack.c.bf16 %v957, %v953
    %v986 = vpack.c.bf16 %v958, %v954
    %v987 = vpack.c.bf16 %v959, %v955
    %v988 = vpack.c.bf16 %v964, %v960
    %v989 = vpack.c.bf16 %v965, %v961
    %v990 = vpack.c.bf16 %v966, %v962
    %v991 = vpack.c.bf16 %v967, %v963
    %v992 = vpack.c.bf16 %v972, %v968
    %v993 = vpack.c.bf16 %v973, %v969
    %v994 = vpack.c.bf16 %v974, %v970
    %v995 = vpack.c.bf16 %v975, %v971
    %v996 = vpack.c.bf16 %v980, %v976
    %v997 = vpack.c.bf16 %v981, %v977
    %v998 = vpack.c.bf16 %v982, %v978
    %v999 = vpack.c.bf16 %v983, %v979
    %1004 = vrot.lane.b32.xlu0 %v987, 17
    %v1005 = vpop.permute.xlu0 %1004
    %1006 = vrot.lane.b32.xlu0 %v991, 17
    %v1007 = vpop.permute.xlu0 %1006
    %1008 = vrot.lane.b32.xlu0 %v995, 17
    %v1009 = vpop.permute.xlu0 %1008
    %1010 = vrot.lane.b32.xlu0 %v999, 17
    %v1011 = vpop.permute.xlu0 %1010
    %1024 = vrot.lane.b32.xlu0 %v984, 17
    %v1025 = vpop.permute.xlu0 %1024
    %1026 = vrot.lane.b32.xlu0 %v985, 17
    %v1027 = vpop.permute.xlu0 %1026
    %1028 = vrot.lane.b32.xlu0 %v986, 17
    %v1029 = vpop.permute.xlu0 %1028
    %1030 = vrot.lane.b32.xlu0 %v988, 17
    %v1031 = vpop.permute.xlu0 %1030
    %1032 = vrot.lane.b32.xlu0 %v989, 17
    %v1033 = vpop.permute.xlu0 %1032
    %1034 = vrot.lane.b32.xlu0 %v990, 17
    %v1035 = vpop.permute.xlu0 %1034
    %1036 = vrot.lane.b32.xlu0 %v992, 17
    %v1037 = vpop.permute.xlu0 %1036
    %1038 = vrot.lane.b32.xlu0 %v993, 17
    %v1039 = vpop.permute.xlu0 %1038
    %1040 = vrot.lane.b32.xlu0 %v994, 17
    %v1041 = vpop.permute.xlu0 %1040
    %1042 = vrot.lane.b32.xlu0 %v996, 17
    %v1043 = vpop.permute.xlu0 %1042
    %1044 = vrot.lane.b32.xlu0 %v997, 17
    %v1045 = vpop.permute.xlu0 %1044
    %1046 = vrot.lane.b32.xlu0 %v998, 17
    %v1047 = vpop.permute.xlu0 %1046
    %vm1048 = vcmask 138240
    %v1049 = vsel %vm1048, %v1025, %v1027
    %v1050 = vsel %vm1048, %v1027, %v1029
    %v1051 = vsel %vm1048, %v1029, %v1005
    %v1052 = vsel %vm1048, %v1031, %v1033
    %v1053 = vsel %vm1048, %v1033, %v1035
    %v1054 = vsel %vm1048, %v1035, %v1007
    %v1055 = vsel %vm1048, %v1037, %v1039
    %v1056 = vsel %vm1048, %v1039, %v1041
    %v1057 = vsel %vm1048, %v1041, %v1009
    %v1058 = vsel %vm1048, %v1043, %v1045
    %v1059 = vsel %vm1048, %v1045, %v1047
    %v1060 = vsel %vm1048, %v1047, %v1011
    %v1075 = vsel %vm64, %v1005, %v1025
    %v1079 = vsel %vm64, %v1007, %v1031
    %v1083 = vsel %vm64, %v1009, %v1037
    %v1087 = vsel %vm64, %v1011, %v1043
    %v1089 = vld [vmem:[%s2] sm:$0x11]
    %v1090 = vld [vmem:[%s2 + $0x8] sm:$0x11]
    %v1093 = vunpack.c.l.b16 %v1089
    %v1094 = vunpack.c.h.b16 %v1089
    %v1095 = vunpack.c.l.b16 %v1090
    %v1096 = vunpack.c.h.b16 %v1090
    %v1097 = vpack.c.b16 %v1093, %v1093
    %v1098 = vpack.c.b16 %v1094, %v1094
    %v1099 = vpack.c.b16 %v1095, %v1095
    %v1100 = vpack.c.b16 %v1096, %v1096
    %v1102 = vpack.i.b16 %v1097, %v1097
    %v1104 = vlaneseq
    %v1105 = vshrl.u32 %v1104, 7
    %v1106 = vsub.s32 0, %v1105
    %v1107 = vrot.slane %v1102, %v1106
    %v1109 = vpack.i.b16 %v1098, %v1098
    %v1111 = vlaneseq
    %v1112 = vshrl.u32 %v1111, 7
    %v1113 = vsub.s32 0, %v1112
    %v1114 = vrot.slane %v1109, %v1113
    %v1116 = vpack.i.b16 %v1099, %v1099
    %v1118 = vlaneseq
    %v1119 = vshrl.u32 %v1118, 7
    %v1120 = vsub.s32 0, %v1119
    %v1121 = vrot.slane %v1116, %v1120
    %v1123 = vpack.i.b16 %v1100, %v1100
    %v1125 = vlaneseq
    %v1126 = vshrl.u32 %v1125, 7
    %v1127 = vsub.s32 0, %v1126
    %v1128 = vrot.slane %v1123, %v1127
    %v1129 = vmul.bf16 %v1075, %v1107
    %v1130 = vmul.bf16 %v1049, %v1114
    %v1131 = vmul.bf16 %v1050, %v1121
    %v1132 = vmul.bf16 %v1051, %v1128
    %v1133 = vmul.bf16 %v1079, %v1107
    %v1134 = vmul.bf16 %v1052, %v1114
    %v1135 = vmul.bf16 %v1053, %v1121
    %v1136 = vmul.bf16 %v1054, %v1128
    %v1137 = vmul.bf16 %v1083, %v1107
    %v1138 = vmul.bf16 %v1055, %v1114
    %v1139 = vmul.bf16 %v1056, %v1121
    %v1140 = vmul.bf16 %v1057, %v1128
    %v1141 = vmul.bf16 %v1087, %v1107
    %v1142 = vmul.bf16 %v1058, %v1114
    %v1143 = vmul.bf16 %v1059, %v1121
    %v1144 = vmul.bf16 %v1060, %v1128
    %1145 = vrot.lane.b32.xlu0 %v987, 16
    %v1146 = vpop.permute.xlu0 %1145
    %1147 = vrot.lane.b32.xlu0 %v991, 16
    %v1148 = vpop.permute.xlu0 %1147
    %1149 = vrot.lane.b32.xlu0 %v995, 16
    %v1150 = vpop.permute.xlu0 %1149
    %1151 = vrot.lane.b32.xlu0 %v999, 16
    %v1152 = vpop.permute.xlu0 %1151
    %1153 = vrot.lane.b32.xlu0 %v984, 16
    %v1154 = vpop.permute.xlu0 %1153
    %1155 = vrot.lane.b32.xlu0 %v985, 16
    %v1156 = vpop.permute.xlu0 %1155
    %1157 = vrot.lane.b32.xlu0 %v986, 16
    %v1158 = vpop.permute.xlu0 %1157
    %1159 = vrot.lane.b32.xlu0 %v988, 16
    %v1160 = vpop.permute.xlu0 %1159
    %1161 = vrot.lane.b32.xlu0 %v989, 16
    %v1162 = vpop.permute.xlu0 %1161
    %1163 = vrot.lane.b32.xlu0 %v990, 16
    %v1164 = vpop.permute.xlu0 %1163
    %1165 = vrot.lane.b32.xlu0 %v992, 16
    %v1166 = vpop.permute.xlu0 %1165
    %1167 = vrot.lane.b32.xlu0 %v993, 16
    %v1168 = vpop.permute.xlu0 %1167
    %1169 = vrot.lane.b32.xlu0 %v994, 16
    %v1170 = vpop.permute.xlu0 %1169
    %1171 = vrot.lane.b32.xlu0 %v996, 16
    %v1172 = vpop.permute.xlu0 %1171
    %1173 = vrot.lane.b32.xlu0 %v997, 16
    %v1174 = vpop.permute.xlu0 %1173
    %1175 = vrot.lane.b32.xlu0 %v998, 16
    %v1176 = vpop.permute.xlu0 %1175
    %vm1177 = vcmask 130048
    %v1178 = vsel %vm1177, %v1154, %v1156
    %v1179 = vsel %vm1177, %v1156, %v1158
    %v1180 = vsel %vm1177, %v1158, %v1146
    %v1181 = vsel %vm1177, %v1160, %v1162
    %v1182 = vsel %vm1177, %v1162, %v1164
    %v1183 = vsel %vm1177, %v1164, %v1148
    %v1184 = vsel %vm1177, %v1166, %v1168
    %v1185 = vsel %vm1177, %v1168, %v1170
    %v1186 = vsel %vm1177, %v1170, %v1150
    %v1187 = vsel %vm1177, %v1172, %v1174
    %v1188 = vsel %vm1177, %v1174, %v1176
    %v1189 = vsel %vm1177, %v1176, %v1152
    %v1204 = vsel %vm112, %v1146, %v1154
    %v1208 = vsel %vm112, %v1148, %v1160
    %v1212 = vsel %vm112, %v1150, %v1166
    %v1216 = vsel %vm112, %v1152, %v1172
    %v1218 = vshrl.u32 %v1097, 16
    %v1219 = vpack.i.b16 %v1218, %v1218
    %v1221 = vlaneseq
    %v1222 = vshrl.u32 %v1221, 7
    %v1223 = vsub.s32 0, %v1222
    %v1224 = vrot.slane %v1219, %v1223
    %v1225 = vshrl.u32 %v1098, 16
    %v1226 = vpack.i.b16 %v1225, %v1225
    %v1228 = vlaneseq
    %v1229 = vshrl.u32 %v1228, 7
    %v1230 = vsub.s32 0, %v1229
    %v1231 = vrot.slane %v1226, %v1230
    %v1232 = vshrl.u32 %v1099, 16
    %v1233 = vpack.i.b16 %v1232, %v1232
    %v1235 = vlaneseq
    %v1236 = vshrl.u32 %v1235, 7
    %v1237 = vsub.s32 0, %v1236
    %v1238 = vrot.slane %v1233, %v1237
    %v1239 = vshrl.u32 %v1100, 16
    %v1240 = vpack.i.b16 %v1239, %v1239
    %v1242 = vlaneseq
    %v1243 = vshrl.u32 %v1242, 7
    %v1244 = vsub.s32 0, %v1243
    %v1245 = vrot.slane %v1240, %v1244
    %v1246 = vmul.bf16 %v1204, %v1224
    %v1247 = vmul.bf16 %v1178, %v1231
    %v1248 = vmul.bf16 %v1179, %v1238
    %v1249 = vmul.bf16 %v1180, %v1245
    %v1250 = vmul.bf16 %v1208, %v1224
    %v1251 = vmul.bf16 %v1181, %v1231
    %v1252 = vmul.bf16 %v1182, %v1238
    %v1253 = vmul.bf16 %v1183, %v1245
    %v1254 = vmul.bf16 %v1212, %v1224
    %v1255 = vmul.bf16 %v1184, %v1231
    %v1256 = vmul.bf16 %v1185, %v1238
    %v1257 = vmul.bf16 %v1186, %v1245
    %v1258 = vmul.bf16 %v1216, %v1224
    %v1259 = vmul.bf16 %v1187, %v1231
    %v1260 = vmul.bf16 %v1188, %v1238
    %v1261 = vmul.bf16 %v1189, %v1245
    %1262 = vrot.lane.b32.xlu0 %v987, 15
    %v1263 = vpop.permute.xlu0 %1262
    %1264 = vrot.lane.b32.xlu0 %v991, 15
    %v1265 = vpop.permute.xlu0 %1264
    %1266 = vrot.lane.b32.xlu0 %v995, 15
    %v1267 = vpop.permute.xlu0 %1266
    %1268 = vrot.lane.b32.xlu0 %v999, 15
    %v1269 = vpop.permute.xlu0 %1268
    %1270 = vrot.lane.b32.xlu0 %v984, 15
    %v1271 = vpop.permute.xlu0 %1270
    %1272 = vrot.lane.b32.xlu0 %v985, 15
    %v1273 = vpop.permute.xlu0 %1272
    %1274 = vrot.lane.b32.xlu0 %v986, 15
    %v1275 = vpop.permute.xlu0 %1274
    %1276 = vrot.lane.b32.xlu0 %v988, 15
    %v1277 = vpop.permute.xlu0 %1276
    %1278 = vrot.lane.b32.xlu0 %v989, 15
    %v1279 = vpop.permute.xlu0 %1278
    %1280 = vrot.lane.b32.xlu0 %v990, 15
    %v1281 = vpop.permute.xlu0 %1280
    %1282 = vrot.lane.b32.xlu0 %v992, 15
    %v1283 = vpop.permute.xlu0 %1282
    %1284 = vrot.lane.b32.xlu0 %v993, 15
    %v1285 = vpop.permute.xlu0 %1284
    %1286 = vrot.lane.b32.xlu0 %v994, 15
    %v1287 = vpop.permute.xlu0 %1286
    %1288 = vrot.lane.b32.xlu0 %v996, 15
    %v1289 = vpop.permute.xlu0 %1288
    %1290 = vrot.lane.b32.xlu0 %v997, 15
    %v1291 = vpop.permute.xlu0 %1290
    %1292 = vrot.lane.b32.xlu0 %v998, 15
    %v1293 = vpop.permute.xlu0 %1292
    %vm1294 = vcmask 121856
    %v1295 = vsel %vm1294, %v1271, %v1273
    %v1296 = vsel %vm1294, %v1273, %v1275
    %v1297 = vsel %vm1294, %v1275, %v1263
    %v1298 = vsel %vm1294, %v1277, %v1279
    %v1299 = vsel %vm1294, %v1279, %v1281
    %v1300 = vsel %vm1294, %v1281, %v1265
    %v1301 = vsel %vm1294, %v1283, %v1285
    %v1302 = vsel %vm1294, %v1285, %v1287
    %v1303 = vsel %vm1294, %v1287, %v1267
    %v1304 = vsel %vm1294, %v1289, %v1291
    %v1305 = vsel %vm1294, %v1291, %v1293
    %v1306 = vsel %vm1294, %v1293, %v1269
    %v1321 = vsel %vm165, %v1263, %v1271
    %v1325 = vsel %vm165, %v1265, %v1277
    %v1329 = vsel %vm165, %v1267, %v1283
    %v1333 = vsel %vm165, %v1269, %v1289
    %v1335 = vld [vmem:[%s2] sm:$0x22]
    %v1336 = vld [vmem:[%s2 + $0x8] sm:$0x22]
    %v1339 = vunpack.c.l.b16 %v1335
    %v1340 = vunpack.c.h.b16 %v1335
    %v1341 = vunpack.c.l.b16 %v1336
    %v1342 = vunpack.c.h.b16 %v1336
    %v1343 = vpack.c.b16 %v1339, %v1339
    %v1344 = vpack.c.b16 %v1340, %v1340
    %v1345 = vpack.c.b16 %v1341, %v1341
    %v1346 = vpack.c.b16 %v1342, %v1342
    %v1348 = vpack.i.b16 %v1343, %v1343
    %v1350 = vlaneseq
    %v1351 = vshrl.u32 %v1350, 7
    %v1352 = vsub.s32 1, %v1351
    %v1353 = vrot.slane %v1348, %v1352
    %v1355 = vpack.i.b16 %v1344, %v1344
    %v1357 = vlaneseq
    %v1358 = vshrl.u32 %v1357, 7
    %v1359 = vsub.s32 1, %v1358
    %v1360 = vrot.slane %v1355, %v1359
    %v1362 = vpack.i.b16 %v1345, %v1345
    %v1364 = vlaneseq
    %v1365 = vshrl.u32 %v1364, 7
    %v1366 = vsub.s32 1, %v1365
    %v1367 = vrot.slane %v1362, %v1366
    %v1369 = vpack.i.b16 %v1346, %v1346
    %v1371 = vlaneseq
    %v1372 = vshrl.u32 %v1371, 7
    %v1373 = vsub.s32 1, %v1372
    %v1374 = vrot.slane %v1369, %v1373
    %v1375 = vmul.bf16 %v1321, %v1353
    %v1376 = vmul.bf16 %v1295, %v1360
    %v1377 = vmul.bf16 %v1296, %v1367
    %v1378 = vmul.bf16 %v1297, %v1374
    %v1379 = vmul.bf16 %v1325, %v1353
    %v1380 = vmul.bf16 %v1298, %v1360
    %v1381 = vmul.bf16 %v1299, %v1367
    %v1382 = vmul.bf16 %v1300, %v1374
    %v1383 = vmul.bf16 %v1329, %v1353
    %v1384 = vmul.bf16 %v1301, %v1360
    %v1385 = vmul.bf16 %v1302, %v1367
    %v1386 = vmul.bf16 %v1303, %v1374
    %v1387 = vmul.bf16 %v1333, %v1353
    %v1388 = vmul.bf16 %v1304, %v1360
    %v1389 = vmul.bf16 %v1305, %v1367
    %v1390 = vmul.bf16 %v1306, %v1374
    %1391 = vrot.lane.b32.xlu0 %v987, 1
    %v1392 = vpop.permute.xlu0 %1391
    %1393 = vrot.lane.b32.xlu0 %v991, 1
    %v1394 = vpop.permute.xlu0 %1393
    %1395 = vrot.lane.b32.xlu0 %v995, 1
    %v1396 = vpop.permute.xlu0 %1395
    %1397 = vrot.lane.b32.xlu0 %v999, 1
    %v1398 = vpop.permute.xlu0 %1397
    %1399 = vrot.lane.b32.xlu0 %v984, 1
    %v1400 = vpop.permute.xlu0 %1399
    %1401 = vrot.lane.b32.xlu0 %v985, 1
    %v1402 = vpop.permute.xlu0 %1401
    %1403 = vrot.lane.b32.xlu0 %v986, 1
    %v1404 = vpop.permute.xlu0 %1403
    %1405 = vrot.lane.b32.xlu0 %v988, 1
    %v1406 = vpop.permute.xlu0 %1405
    %1407 = vrot.lane.b32.xlu0 %v989, 1
    %v1408 = vpop.permute.xlu0 %1407
    %1409 = vrot.lane.b32.xlu0 %v990, 1
    %v1410 = vpop.permute.xlu0 %1409
    %1411 = vrot.lane.b32.xlu0 %v992, 1
    %v1412 = vpop.permute.xlu0 %1411
    %1413 = vrot.lane.b32.xlu0 %v993, 1
    %v1414 = vpop.permute.xlu0 %1413
    %1415 = vrot.lane.b32.xlu0 %v994, 1
    %v1416 = vpop.permute.xlu0 %1415
    %1417 = vrot.lane.b32.xlu0 %v996, 1
    %v1418 = vpop.permute.xlu0 %1417
    %1419 = vrot.lane.b32.xlu0 %v997, 1
    %v1420 = vpop.permute.xlu0 %1419
    %1421 = vrot.lane.b32.xlu0 %v998, 1
    %v1422 = vpop.permute.xlu0 %1421
    %vm1423 = vcmask 7168
    %v1424 = vsel %vm1423, %v1400, %v1402
    %v1425 = vsel %vm1423, %v1402, %v1404
    %v1426 = vsel %vm1423, %v1404, %v1392
    %v1427 = vsel %vm1423, %v1406, %v1408
    %v1428 = vsel %vm1423, %v1408, %v1410
    %v1429 = vsel %vm1423, %v1410, %v1394
    %v1430 = vsel %vm1423, %v1412, %v1414
    %v1431 = vsel %vm1423, %v1414, %v1416
    %v1432 = vsel %vm1423, %v1416, %v1396
    %v1433 = vsel %vm1423, %v1418, %v1420
    %v1434 = vsel %vm1423, %v1420, %v1422
    %v1435 = vsel %vm1423, %v1422, %v1398
    %v1450 = vsel %vm218, %v1392, %v1400
    %v1454 = vsel %vm218, %v1394, %v1406
    %v1458 = vsel %vm218, %v1396, %v1412
    %v1462 = vsel %vm218, %v1398, %v1418
    %v1464 = vshrl.u32 %v1343, 16
    %v1465 = vpack.i.b16 %v1464, %v1464
    %v1467 = vlaneseq
    %v1468 = vshrl.u32 %v1467, 7
    %v1469 = vsub.s32 1, %v1468
    %v1470 = vrot.slane %v1465, %v1469
    %v1471 = vshrl.u32 %v1344, 16
    %v1472 = vpack.i.b16 %v1471, %v1471
    %v1474 = vlaneseq
    %v1475 = vshrl.u32 %v1474, 7
    %v1476 = vsub.s32 1, %v1475
    %v1477 = vrot.slane %v1472, %v1476
    %v1478 = vshrl.u32 %v1345, 16
    %v1479 = vpack.i.b16 %v1478, %v1478
    %v1481 = vlaneseq
    %v1482 = vshrl.u32 %v1481, 7
    %v1483 = vsub.s32 1, %v1482
    %v1484 = vrot.slane %v1479, %v1483
    %v1485 = vshrl.u32 %v1346, 16
    %v1486 = vpack.i.b16 %v1485, %v1485
    %v1488 = vlaneseq
    %v1489 = vshrl.u32 %v1488, 7
    %v1490 = vsub.s32 1, %v1489
    %v1491 = vrot.slane %v1486, %v1490
    %v1492 = vmul.bf16 %v1450, %v1470
    %v1493 = vmul.bf16 %v1424, %v1477
    %v1494 = vmul.bf16 %v1425, %v1484
    %v1495 = vmul.bf16 %v1426, %v1491
    %v1496 = vmul.bf16 %v1454, %v1470
    %v1497 = vmul.bf16 %v1427, %v1477
    %v1498 = vmul.bf16 %v1428, %v1484
    %v1499 = vmul.bf16 %v1429, %v1491
    %v1500 = vmul.bf16 %v1458, %v1470
    %v1501 = vmul.bf16 %v1430, %v1477
    %v1502 = vmul.bf16 %v1431, %v1484
    %v1503 = vmul.bf16 %v1432, %v1491
    %v1504 = vmul.bf16 %v1462, %v1470
    %v1505 = vmul.bf16 %v1433, %v1477
    %v1506 = vmul.bf16 %v1434, %v1484
    %v1507 = vmul.bf16 %v1435, %v1491
    %1508 = vrot.lane.b32.xlu0 %v984, 127
    %v1509 = vpop.permute.xlu0 %1508
    %1510 = vrot.lane.b32.xlu0 %v985, 127
    %v1511 = vpop.permute.xlu0 %1510
    %1512 = vrot.lane.b32.xlu0 %v986, 127
    %v1513 = vpop.permute.xlu0 %1512
    %1514 = vrot.lane.b32.xlu0 %v987, 127
    %v1515 = vpop.permute.xlu0 %1514
    %1516 = vrot.lane.b32.xlu0 %v988, 127
    %v1517 = vpop.permute.xlu0 %1516
    %1518 = vrot.lane.b32.xlu0 %v989, 127
    %v1519 = vpop.permute.xlu0 %1518
    %1520 = vrot.lane.b32.xlu0 %v990, 127
    %v1521 = vpop.permute.xlu0 %1520
    %1522 = vrot.lane.b32.xlu0 %v991, 127
    %v1523 = vpop.permute.xlu0 %1522
    %1524 = vrot.lane.b32.xlu0 %v992, 127
    %v1525 = vpop.permute.xlu0 %1524
    %1526 = vrot.lane.b32.xlu0 %v993, 127
    %v1527 = vpop.permute.xlu0 %1526
    %1528 = vrot.lane.b32.xlu0 %v994, 127
    %v1529 = vpop.permute.xlu0 %1528
    %1530 = vrot.lane.b32.xlu0 %v995, 127
    %v1531 = vpop.permute.xlu0 %1530
    %1532 = vrot.lane.b32.xlu0 %v996, 127
    %v1533 = vpop.permute.xlu0 %1532
    %1534 = vrot.lane.b32.xlu0 %v997, 127
    %v1535 = vpop.permute.xlu0 %1534
    %1536 = vrot.lane.b32.xlu0 %v998, 127
    %v1537 = vpop.permute.xlu0 %1536
    %1538 = vrot.lane.b32.xlu0 %v999, 127
    %v1539 = vpop.permute.xlu0 %1538
    %vm1540 = vcmask 1039360
    %v1541 = vsel %vm1540, %v1509, %v1511
    %v1542 = vsel %vm1540, %v1511, %v1513
    %v1543 = vsel %vm1540, %v1513, %v1515
    %v1544 = vsel %vm1540, %v1517, %v1519
    %v1545 = vsel %vm1540, %v1519, %v1521
    %v1546 = vsel %vm1540, %v1521, %v1523
    %v1547 = vsel %vm1540, %v1525, %v1527
    %v1548 = vsel %vm1540, %v1527, %v1529
    %v1549 = vsel %vm1540, %v1529, %v1531
    %v1550 = vsel %vm1540, %v1533, %v1535
    %v1551 = vsel %vm1540, %v1535, %v1537
    %v1552 = vsel %vm1540, %v1537, %v1539
    %v1567 = vsel %vm282, %v1515, %v1509
    %v1571 = vsel %vm282, %v1523, %v1517
    %v1575 = vsel %vm282, %v1531, %v1525
    %v1579 = vsel %vm282, %v1539, %v1533
    %v1581 = vld [vmem:[%s2] sm:$0x44]
    %v1582 = vld [vmem:[%s2 + $0x8] sm:$0x44]
    %v1585 = vunpack.c.l.b16 %v1581
    %v1586 = vunpack.c.h.b16 %v1581
    %v1587 = vunpack.c.l.b16 %v1582
    %v1588 = vunpack.c.h.b16 %v1582
    %v1589 = vpack.c.b16 %v1585, %v1585
    %v1590 = vpack.c.b16 %v1586, %v1586
    %v1591 = vpack.c.b16 %v1587, %v1587
    %v1592 = vpack.c.b16 %v1588, %v1588
    %v1594 = vshrl.u32 %v1589, 16
    %v1595 = vpack.i.b16 %v1594, %v1594
    %v1597 = vlaneseq
    %v1598 = vshrl.u32 %v1597, 7
    %v1599 = vsub.s32 2, %v1598
    %v1600 = vrot.slane %v1595, %v1599
    %v1602 = vshrl.u32 %v1590, 16
    %v1603 = vpack.i.b16 %v1602, %v1602
    %v1605 = vlaneseq
    %v1606 = vshrl.u32 %v1605, 7
    %v1607 = vsub.s32 2, %v1606
    %v1608 = vrot.slane %v1603, %v1607
    %v1610 = vshrl.u32 %v1591, 16
    %v1611 = vpack.i.b16 %v1610, %v1610
    %v1613 = vlaneseq
    %v1614 = vshrl.u32 %v1613, 7
    %v1615 = vsub.s32 2, %v1614
    %v1616 = vrot.slane %v1611, %v1615
    %v1618 = vshrl.u32 %v1592, 16
    %v1619 = vpack.i.b16 %v1618, %v1618
    %v1621 = vlaneseq
    %v1622 = vshrl.u32 %v1621, 7
    %v1623 = vsub.s32 2, %v1622
    %v1624 = vrot.slane %v1619, %v1623
    %v1625 = vmul.bf16 %v1541, %v1600
    %v1626 = vmul.bf16 %v1542, %v1608
    %v1627 = vmul.bf16 %v1543, %v1616
    %v1628 = vmul.bf16 %v1567, %v1624
    %v1629 = vmul.bf16 %v1544, %v1600
    %v1630 = vmul.bf16 %v1545, %v1608
    %v1631 = vmul.bf16 %v1546, %v1616
    %v1632 = vmul.bf16 %v1571, %v1624
    %v1633 = vmul.bf16 %v1547, %v1600
    %v1634 = vmul.bf16 %v1548, %v1608
    %v1635 = vmul.bf16 %v1549, %v1616
    %v1636 = vmul.bf16 %v1575, %v1624
    %v1637 = vmul.bf16 %v1550, %v1600
    %v1638 = vmul.bf16 %v1551, %v1608
    %v1639 = vmul.bf16 %v1552, %v1616
    %v1640 = vmul.bf16 %v1579, %v1624
    %1641 = vrot.lane.b32.xlu0 %v984, 113
    %v1642 = vpop.permute.xlu0 %1641
    %1643 = vrot.lane.b32.xlu0 %v985, 113
    %v1644 = vpop.permute.xlu0 %1643
    %1645 = vrot.lane.b32.xlu0 %v986, 113
    %v1646 = vpop.permute.xlu0 %1645
    %1647 = vrot.lane.b32.xlu0 %v987, 113
    %v1648 = vpop.permute.xlu0 %1647
    %1649 = vrot.lane.b32.xlu0 %v988, 113
    %v1650 = vpop.permute.xlu0 %1649
    %1651 = vrot.lane.b32.xlu0 %v989, 113
    %v1652 = vpop.permute.xlu0 %1651
    %1653 = vrot.lane.b32.xlu0 %v990, 113
    %v1654 = vpop.permute.xlu0 %1653
    %1655 = vrot.lane.b32.xlu0 %v991, 113
    %v1656 = vpop.permute.xlu0 %1655
    %1657 = vrot.lane.b32.xlu0 %v992, 113
    %v1658 = vpop.permute.xlu0 %1657
    %1659 = vrot.lane.b32.xlu0 %v993, 113
    %v1660 = vpop.permute.xlu0 %1659
    %1661 = vrot.lane.b32.xlu0 %v994, 113
    %v1662 = vpop.permute.xlu0 %1661
    %1663 = vrot.lane.b32.xlu0 %v995, 113
    %v1664 = vpop.permute.xlu0 %1663
    %1665 = vrot.lane.b32.xlu0 %v996, 113
    %v1666 = vpop.permute.xlu0 %1665
    %1667 = vrot.lane.b32.xlu0 %v997, 113
    %v1668 = vpop.permute.xlu0 %1667
    %1669 = vrot.lane.b32.xlu0 %v998, 113
    %v1670 = vpop.permute.xlu0 %1669
    %1671 = vrot.lane.b32.xlu0 %v999, 113
    %v1672 = vpop.permute.xlu0 %1671
    %vm1673 = vcmask 924672
    %v1674 = vsel %vm1673, %v1642, %v1644
    %v1675 = vsel %vm1673, %v1644, %v1646
    %v1676 = vsel %vm1673, %v1646, %v1648
    %v1677 = vsel %vm1673, %v1650, %v1652
    %v1678 = vsel %vm1673, %v1652, %v1654
    %v1679 = vsel %vm1673, %v1654, %v1656
    %v1680 = vsel %vm1673, %v1658, %v1660
    %v1681 = vsel %vm1673, %v1660, %v1662
    %v1682 = vsel %vm1673, %v1662, %v1664
    %v1683 = vsel %vm1673, %v1666, %v1668
    %v1684 = vsel %vm1673, %v1668, %v1670
    %v1685 = vsel %vm1673, %v1670, %v1672
    %v1700 = vsel %vm335, %v1648, %v1642
    %v1704 = vsel %vm335, %v1656, %v1650
    %v1708 = vsel %vm335, %v1664, %v1658
    %v1712 = vsel %vm335, %v1672, %v1666
    %v1714 = vld [vmem:[%s2] sm:$0x88]
    %v1715 = vld [vmem:[%s2 + $0x8] sm:$0x88]
    %v1718 = vunpack.c.l.b16 %v1714
    %v1719 = vunpack.c.h.b16 %v1714
    %v1720 = vunpack.c.l.b16 %v1715
    %v1721 = vunpack.c.h.b16 %v1715
    %v1722 = vpack.c.b16 %v1718, %v1718
    %v1723 = vpack.c.b16 %v1719, %v1719
    %v1724 = vpack.c.b16 %v1720, %v1720
    %v1725 = vpack.c.b16 %v1721, %v1721
    %v1727 = vpack.i.b16 %v1722, %v1722
    %v1729 = vlaneseq
    %v1730 = vshrl.u32 %v1729, 7
    %v1731 = vsub.s32 3, %v1730
    %v1732 = vrot.slane %v1727, %v1731
    %v1734 = vpack.i.b16 %v1723, %v1723
    %v1736 = vlaneseq
    %v1737 = vshrl.u32 %v1736, 7
    %v1738 = vsub.s32 3, %v1737
    %v1739 = vrot.slane %v1734, %v1738
    %v1741 = vpack.i.b16 %v1724, %v1724
    %v1743 = vlaneseq
    %v1744 = vshrl.u32 %v1743, 7
    %v1745 = vsub.s32 3, %v1744
    %v1746 = vrot.slane %v1741, %v1745
    %v1748 = vpack.i.b16 %v1725, %v1725
    %v1750 = vlaneseq
    %v1751 = vshrl.u32 %v1750, 7
    %v1752 = vsub.s32 3, %v1751
    %v1753 = vrot.slane %v1748, %v1752
    %v1754 = vmul.bf16 %v1674, %v1732
    %v1755 = vmul.bf16 %v1675, %v1739
    %v1756 = vmul.bf16 %v1676, %v1746
    %v1757 = vmul.bf16 %v1700, %v1753
    %v1758 = vmul.bf16 %v1677, %v1732
    %v1759 = vmul.bf16 %v1678, %v1739
    %v1760 = vmul.bf16 %v1679, %v1746
    %v1761 = vmul.bf16 %v1704, %v1753
    %v1762 = vmul.bf16 %v1680, %v1732
    %v1763 = vmul.bf16 %v1681, %v1739
    %v1764 = vmul.bf16 %v1682, %v1746
    %v1765 = vmul.bf16 %v1708, %v1753
    %v1766 = vmul.bf16 %v1683, %v1732
    %v1767 = vmul.bf16 %v1684, %v1739
    %v1768 = vmul.bf16 %v1685, %v1746
    %v1769 = vmul.bf16 %v1712, %v1753
    %1770 = vrot.lane.b32.xlu0 %v984, 112
    %v1771 = vpop.permute.xlu0 %1770
    %1772 = vrot.lane.b32.xlu0 %v985, 112
    %v1773 = vpop.permute.xlu0 %1772
    %1774 = vrot.lane.b32.xlu0 %v986, 112
    %v1775 = vpop.permute.xlu0 %1774
    %1776 = vrot.lane.b32.xlu0 %v987, 112
    %v1777 = vpop.permute.xlu0 %1776
    %1778 = vrot.lane.b32.xlu0 %v988, 112
    %v1779 = vpop.permute.xlu0 %1778
    %1780 = vrot.lane.b32.xlu0 %v989, 112
    %v1781 = vpop.permute.xlu0 %1780
    %1782 = vrot.lane.b32.xlu0 %v990, 112
    %v1783 = vpop.permute.xlu0 %1782
    %1784 = vrot.lane.b32.xlu0 %v991, 112
    %v1785 = vpop.permute.xlu0 %1784
    %1786 = vrot.lane.b32.xlu0 %v992, 112
    %v1787 = vpop.permute.xlu0 %1786
    %1788 = vrot.lane.b32.xlu0 %v993, 112
    %v1789 = vpop.permute.xlu0 %1788
    %1790 = vrot.lane.b32.xlu0 %v994, 112
    %v1791 = vpop.permute.xlu0 %1790
    %1792 = vrot.lane.b32.xlu0 %v995, 112
    %v1793 = vpop.permute.xlu0 %1792
    %1794 = vrot.lane.b32.xlu0 %v996, 112
    %v1795 = vpop.permute.xlu0 %1794
    %1796 = vrot.lane.b32.xlu0 %v997, 112
    %v1797 = vpop.permute.xlu0 %1796
    %1798 = vrot.lane.b32.xlu0 %v998, 112
    %v1799 = vpop.permute.xlu0 %1798
    %1800 = vrot.lane.b32.xlu0 %v999, 112
    %v1801 = vpop.permute.xlu0 %1800
    %vm1802 = vcmask 916480
    %v1803 = vsel %vm1802, %v1771, %v1773
    %v1804 = vsel %vm1802, %v1773, %v1775
    %v1805 = vsel %vm1802, %v1775, %v1777
    %v1806 = vsel %vm1802, %v1779, %v1781
    %v1807 = vsel %vm1802, %v1781, %v1783
    %v1808 = vsel %vm1802, %v1783, %v1785
    %v1809 = vsel %vm1802, %v1787, %v1789
    %v1810 = vsel %vm1802, %v1789, %v1791
    %v1811 = vsel %vm1802, %v1791, %v1793
    %v1812 = vsel %vm1802, %v1795, %v1797
    %v1813 = vsel %vm1802, %v1797, %v1799
    %v1814 = vsel %vm1802, %v1799, %v1801
    %v1829 = vsel %vm388, %v1777, %v1771
    %v1833 = vsel %vm388, %v1785, %v1779
    %v1837 = vsel %vm388, %v1793, %v1787
    %v1841 = vsel %vm388, %v1801, %v1795
    %v1843 = vshrl.u32 %v1722, 16
    %v1844 = vpack.i.b16 %v1843, %v1843
    %v1846 = vlaneseq
    %v1847 = vshrl.u32 %v1846, 7
    %v1848 = vsub.s32 3, %v1847
    %v1849 = vrot.slane %v1844, %v1848
    %v1850 = vshrl.u32 %v1723, 16
    %v1851 = vpack.i.b16 %v1850, %v1850
    %v1853 = vlaneseq
    %v1854 = vshrl.u32 %v1853, 7
    %v1855 = vsub.s32 3, %v1854
    %v1856 = vrot.slane %v1851, %v1855
    %v1857 = vshrl.u32 %v1724, 16
    %v1858 = vpack.i.b16 %v1857, %v1857
    %v1860 = vlaneseq
    %v1861 = vshrl.u32 %v1860, 7
    %v1862 = vsub.s32 3, %v1861
    %v1863 = vrot.slane %v1858, %v1862
    %v1864 = vshrl.u32 %v1725, 16
    %v1865 = vpack.i.b16 %v1864, %v1864
    %v1867 = vlaneseq
    %v1868 = vshrl.u32 %v1867, 7
    %v1869 = vsub.s32 3, %v1868
    %v1870 = vrot.slane %v1865, %v1869
    %v1871 = vmul.bf16 %v1803, %v1849
    %v1872 = vmul.bf16 %v1804, %v1856
    %v1873 = vmul.bf16 %v1805, %v1863
    %v1874 = vmul.bf16 %v1829, %v1870
    %v1875 = vmul.bf16 %v1806, %v1849
    %v1876 = vmul.bf16 %v1807, %v1856
    %v1877 = vmul.bf16 %v1808, %v1863
    %v1878 = vmul.bf16 %v1833, %v1870
    %v1879 = vmul.bf16 %v1809, %v1849
    %v1880 = vmul.bf16 %v1810, %v1856
    %v1881 = vmul.bf16 %v1811, %v1863
    %v1882 = vmul.bf16 %v1837, %v1870
    %v1883 = vmul.bf16 %v1812, %v1849
    %v1884 = vmul.bf16 %v1813, %v1856
    %v1885 = vmul.bf16 %v1814, %v1863
    %v1886 = vmul.bf16 %v1841, %v1870
    %1887 = vrot.lane.b32.xlu0 %v984, 111
    %v1888 = vpop.permute.xlu0 %1887
    %1889 = vrot.lane.b32.xlu0 %v985, 111
    %v1890 = vpop.permute.xlu0 %1889
    %1891 = vrot.lane.b32.xlu0 %v986, 111
    %v1892 = vpop.permute.xlu0 %1891
    %1893 = vrot.lane.b32.xlu0 %v987, 111
    %v1894 = vpop.permute.xlu0 %1893
    %1895 = vrot.lane.b32.xlu0 %v988, 111
    %v1896 = vpop.permute.xlu0 %1895
    %1897 = vrot.lane.b32.xlu0 %v989, 111
    %v1898 = vpop.permute.xlu0 %1897
    %1899 = vrot.lane.b32.xlu0 %v990, 111
    %v1900 = vpop.permute.xlu0 %1899
    %1901 = vrot.lane.b32.xlu0 %v991, 111
    %v1902 = vpop.permute.xlu0 %1901
    %1903 = vrot.lane.b32.xlu0 %v992, 111
    %v1904 = vpop.permute.xlu0 %1903
    %1905 = vrot.lane.b32.xlu0 %v993, 111
    %v1906 = vpop.permute.xlu0 %1905
    %1907 = vrot.lane.b32.xlu0 %v994, 111
    %v1908 = vpop.permute.xlu0 %1907
    %1909 = vrot.lane.b32.xlu0 %v995, 111
    %v1910 = vpop.permute.xlu0 %1909
    %1911 = vrot.lane.b32.xlu0 %v996, 111
    %v1912 = vpop.permute.xlu0 %1911
    %1913 = vrot.lane.b32.xlu0 %v997, 111
    %v1914 = vpop.permute.xlu0 %1913
    %1915 = vrot.lane.b32.xlu0 %v998, 111
    %v1916 = vpop.permute.xlu0 %1915
    %1917 = vrot.lane.b32.xlu0 %v999, 111
    %v1918 = vpop.permute.xlu0 %1917
    %vm1919 = vcmask 908288
    %v1920 = vsel %vm1919, %v1888, %v1890
    %v1921 = vsel %vm1919, %v1890, %v1892
    %v1922 = vsel %vm1919, %v1892, %v1894
    %v1923 = vsel %vm1919, %v1896, %v1898
    %v1924 = vsel %vm1919, %v1898, %v1900
    %v1925 = vsel %vm1919, %v1900, %v1902
    %v1926 = vsel %vm1919, %v1904, %v1906
    %v1927 = vsel %vm1919, %v1906, %v1908
    %v1928 = vsel %vm1919, %v1908, %v1910
    %v1929 = vsel %vm1919, %v1912, %v1914
    %v1930 = vsel %vm1919, %v1914, %v1916
    %v1931 = vsel %vm1919, %v1916, %v1918
    %v1946 = vsel %vm441, %v1894, %v1888
    %v1950 = vsel %vm441, %v1902, %v1896
    %v1954 = vsel %vm441, %v1910, %v1904
    %v1958 = vsel %vm441, %v1918, %v1912
    %v1960 = vld [vmem:[%s2 + $0x10] sm:$0x11]
    %v1961 = vld [vmem:[%s2 + $0x18] sm:$0x11]
    %v1964 = vunpack.c.l.b16 %v1960
    %v1965 = vunpack.c.h.b16 %v1960
    %v1966 = vunpack.c.l.b16 %v1961
    %v1967 = vunpack.c.h.b16 %v1961
    %v1968 = vpack.c.b16 %v1964, %v1964
    %v1969 = vpack.c.b16 %v1965, %v1965
    %v1970 = vpack.c.b16 %v1966, %v1966
    %v1971 = vpack.c.b16 %v1967, %v1967
    %v1973 = vpack.i.b16 %v1968, %v1968
    %v1975 = vlaneseq
    %v1976 = vshrl.u32 %v1975, 7
    %v1977 = vsub.s32 0, %v1976
    %v1978 = vrot.slane %v1973, %v1977
    %v1980 = vpack.i.b16 %v1969, %v1969
    %v1982 = vlaneseq
    %v1983 = vshrl.u32 %v1982, 7
    %v1984 = vsub.s32 0, %v1983
    %v1985 = vrot.slane %v1980, %v1984
    %v1987 = vpack.i.b16 %v1970, %v1970
    %v1989 = vlaneseq
    %v1990 = vshrl.u32 %v1989, 7
    %v1991 = vsub.s32 0, %v1990
    %v1992 = vrot.slane %v1987, %v1991
    %v1994 = vpack.i.b16 %v1971, %v1971
    %v1996 = vlaneseq
    %v1997 = vshrl.u32 %v1996, 7
    %v1998 = vsub.s32 0, %v1997
    %v1999 = vrot.slane %v1994, %v1998
    %v2000 = vmul.bf16 %v1920, %v1978
    %v2001 = vmul.bf16 %v1921, %v1985
    %v2002 = vmul.bf16 %v1922, %v1992
    %v2003 = vmul.bf16 %v1946, %v1999
    %v2004 = vmul.bf16 %v1923, %v1978
    %v2005 = vmul.bf16 %v1924, %v1985
    %v2006 = vmul.bf16 %v1925, %v1992
    %v2007 = vmul.bf16 %v1950, %v1999
    %v2008 = vmul.bf16 %v1926, %v1978
    %v2009 = vmul.bf16 %v1927, %v1985
    %v2010 = vmul.bf16 %v1928, %v1992
    %v2011 = vmul.bf16 %v1954, %v1999
    %v2012 = vmul.bf16 %v1929, %v1978
    %v2013 = vmul.bf16 %v1930, %v1985
    %v2014 = vmul.bf16 %v1931, %v1992
    %v2015 = vmul.bf16 %v1958, %v1999
    %v2016 = vld [vmem:[%s8] sm:$0xff]
    %v2017 = vld [vmem:[%s8 + $0x8] sm:$0xff]
    %v2018 = vld [vmem:[%s8 + $0x10] sm:$0xf]
    %v2019 = vld [vmem:[%s8 + $0x14] sm:$0xff]
    %v2020 = vld [vmem:[%s8 + $0x1c] sm:$0xff]
    %v2021 = vld [vmem:[%s8 + $0x24] sm:$0xf]
    %v2022 = vld [vmem:[%s8 + $0x28] sm:$0xff]
    %v2023 = vld [vmem:[%s8 + $0x30] sm:$0xff]
    %v2024 = vld [vmem:[%s8 + $0x38] sm:$0xf]
    %v2025 = vld [vmem:[%s8 + $0x3c] sm:$0xff]
    %v2026 = vld [vmem:[%s8 + $0x44] sm:$0xff]
    %v2027 = vld [vmem:[%s8 + $0x4c] sm:$0xf]
    %v2028 = vld [vmem:[%s8 + $0x50] sm:$0xff]
    %v2029 = vld [vmem:[%s8 + $0x58] sm:$0xff]
    %v2030 = vld [vmem:[%s8 + $0x60] sm:$0xf]
    %v2031 = vld [vmem:[%s8 + $0x64] sm:$0xff]
    %v2032 = vld [vmem:[%s8 + $0x6c] sm:$0xff]
    %v2033 = vld [vmem:[%s8 + $0x74] sm:$0xf]
    %v2034 = vld [vmem:[%s8 + $0x78] sm:$0xff]
    %v2035 = vld [vmem:[%s8 + $0x80] sm:$0xff]
    %v2036 = vld [vmem:[%s8 + $0x88] sm:$0xf]
    %v2037 = vld [vmem:[%s8 + $0x8c] sm:$0xff]
    %v2038 = vld [vmem:[%s8 + $0x94] sm:$0xff]
    %v2039 = vld [vmem:[%s8 + $0x9c] sm:$0xf]
    %v2064 = vunpack.c.l.b16 %v2016
    %v2065 = vunpack.c.h.b16 %v2016
    %v2066 = vunpack.c.l.b16 %v2017
    %v2067 = vunpack.c.h.b16 %v2017
    %v2068 = vunpack.c.l.b16 %v2018
    %v2069 = vunpack.c.l.b16 %v2019
    %v2070 = vunpack.c.h.b16 %v2019
    %v2071 = vunpack.c.l.b16 %v2020
    %v2072 = vunpack.c.h.b16 %v2020
    %v2073 = vunpack.c.l.b16 %v2021
    %v2074 = vunpack.c.l.b16 %v2022
    %v2075 = vunpack.c.h.b16 %v2022
    %v2076 = vunpack.c.l.b16 %v2023
    %v2077 = vunpack.c.h.b16 %v2023
    %v2078 = vunpack.c.l.b16 %v2024
    %v2079 = vunpack.c.l.b16 %v2025
    %v2080 = vunpack.c.h.b16 %v2025
    %v2081 = vunpack.c.l.b16 %v2026
    %v2082 = vunpack.c.h.b16 %v2026
    %v2083 = vunpack.c.l.b16 %v2027
    %v2084 = vunpack.c.l.b16 %v2028
    %v2085 = vunpack.c.h.b16 %v2028
    %v2086 = vunpack.c.l.b16 %v2029
    %v2087 = vunpack.c.h.b16 %v2029
    %v2088 = vunpack.c.l.b16 %v2030
    %v2089 = vunpack.c.l.b16 %v2031
    %v2090 = vunpack.c.h.b16 %v2031
    %v2091 = vunpack.c.l.b16 %v2032
    %v2092 = vunpack.c.h.b16 %v2032
    %v2093 = vunpack.c.l.b16 %v2033
    %v2094 = vunpack.c.l.b16 %v2034
    %v2095 = vunpack.c.h.b16 %v2034
    %v2096 = vunpack.c.l.b16 %v2035
    %v2097 = vunpack.c.h.b16 %v2035
    %v2098 = vunpack.c.l.b16 %v2036
    %v2099 = vunpack.c.l.b16 %v2037
    %v2100 = vunpack.c.h.b16 %v2037
    %v2101 = vunpack.c.l.b16 %v2038
    %v2102 = vunpack.c.h.b16 %v2038
    %v2103 = vunpack.c.l.b16 %v2039
    %v2104 = vpack.c.b16 %v2069, %v2064
    %v2105 = vpack.c.b16 %v2070, %v2065
    %v2106 = vpack.c.b16 %v2071, %v2066
    %v2107 = vpack.c.b16 %v2072, %v2067
    %v2108 = vpack.c.b16 %v2073, %v2068
    %v2109 = vpack.c.b16 %v2079, %v2074
    %v2110 = vpack.c.b16 %v2080, %v2075
    %v2111 = vpack.c.b16 %v2081, %v2076
    %v2112 = vpack.c.b16 %v2082, %v2077
    %v2113 = vpack.c.b16 %v2083, %v2078
    %v2114 = vpack.c.b16 %v2089, %v2084
    %v2115 = vpack.c.b16 %v2090, %v2085
    %v2116 = vpack.c.b16 %v2091, %v2086
    %v2117 = vpack.c.b16 %v2092, %v2087
    %v2118 = vpack.c.b16 %v2093, %v2088
    %v2119 = vpack.c.b16 %v2099, %v2094
    %v2120 = vpack.c.b16 %v2100, %v2095
    %v2121 = vpack.c.b16 %v2101, %v2096
    %v2122 = vpack.c.b16 %v2102, %v2097
    %v2123 = vpack.c.b16 %v2103, %v2098
    %vm2140 = vcmask 523264
    %v2142 = vsel %vm2140, %v2108, 0
    %v2145 = vsel %vm2140, %v2113, 0
    %v2148 = vsel %vm2140, %v2118, 0
    %v2151 = vsel %vm2140, %v2123, 0
    %2153 = vmatprep.subr.bf16.mxu0 %v1259
    %2154 = vmatpush1.bf16.msra.mxu0 %v1258
    %2155 = vmatprep.subr.bf16.mxu0 %v1255
    %2156 = vmatpush1.bf16.msra.mxu0 %v1254
    %2157 = vmatprep.subr.bf16.mxu0 %v1251
    %2158 = vmatpush1.bf16.msra.mxu0 %v1250
    %2159 = vmatprep.subr.bf16.mxu0 %v1247
    %2160 = vmatpush1.bf16.msra.mxu0 %v1246
    %2161 = vmatprep.subr.bf16.mxu0 %v1142
    %2162 = vmatpush1.bf16.msra.mxu0 %v1141
    %2163 = vmatprep.subr.bf16.mxu0 %v1138
    %2164 = vmatpush1.bf16.msra.mxu0 %v1137
    %2165 = vmatprep.subr.bf16.mxu0 %v1134
    %2166 = vmatpush1.bf16.msra.mxu0 %v1133
    %2167 = vmatprep.subr.bf16.mxu0 %v1130
    %2168 = vmatpush1.bf16.msra.mxu0 %v1129
    %2169 = vmatprep.subr.bf16.mxu0 %v1505
    %2170 = vmatpush2.bf16.msra.mxu0 %v1504
    %2171 = vmatprep.subr.bf16.mxu0 %v1501
    %2172 = vmatpush2.bf16.msra.mxu0 %v1500
    %2173 = vmatprep.subr.bf16.mxu0 %v1497
    %2174 = vmatpush2.bf16.msra.mxu0 %v1496
    %2175 = vmatprep.subr.bf16.mxu0 %v1493
    %2176 = vmatpush2.bf16.msra.mxu0 %v1492
    %2177 = vmatprep.subr.bf16.mxu0 %v1388
    %2178 = vmatpush2.bf16.msra.mxu0 %v1387
    %2179 = vmatprep.subr.bf16.mxu0 %v1384
    %2180 = vmatpush2.bf16.msra.mxu0 %v1383
    %2181 = vmatprep.subr.bf16.mxu0 %v1380
    %2182 = vmatpush2.bf16.msra.mxu0 %v1379
    %2183 = vmatprep.subr.bf16.mxu0 %v1376
    %2184 = vmatpush2.bf16.msra.mxu0 %v1375
    %2185 = vmatprep.mubr.bf16.mxu0 %v2105
    %2186 = vmatmul.mubr.bf16.gmra.mxu0 %v2104
    %v2187 = vpop.f32.mrf.mxu0
    %v2188 = vadd.f32 0.0, %v2187
    %v2189 = vpop.f32.mrf.mxu0
    %v2190 = vadd.f32 0.0, %v2189
    %v2191 = vpop.f32.mrf.mxu0
    %v2192 = vadd.f32 0.0, %v2191
    %v2193 = vpop.f32.mrf.mxu0
    %v2194 = vadd.f32 0.0, %v2193
    %2195 = vmatprep.mubr.bf16.mxu0 %v2110
    %2196 = vmatmul.mubr.bf16.gmra.mxu0 %v2109
    %v2197 = vpop.f32.mrf.mxu0
    %v2198 = vadd.f32 0.0, %v2197
    %v2199 = vpop.f32.mrf.mxu0
    %v2200 = vadd.f32 0.0, %v2199
    %v2201 = vpop.f32.mrf.mxu0
    %v2202 = vadd.f32 0.0, %v2201
    %v2203 = vpop.f32.mrf.mxu0
    %v2204 = vadd.f32 0.0, %v2203
    %2205 = vmatprep.mubr.bf16.mxu0 %v2115
    %2206 = vmatmul.mubr.bf16.gmra.mxu0 %v2114
    %v2207 = vpop.f32.mrf.mxu0
    %v2208 = vadd.f32 0.0, %v2207
    %v2209 = vpop.f32.mrf.mxu0
    %v2210 = vadd.f32 0.0, %v2209
    %v2211 = vpop.f32.mrf.mxu0
    %v2212 = vadd.f32 0.0, %v2211
    %v2213 = vpop.f32.mrf.mxu0
    %v2214 = vadd.f32 0.0, %v2213
    %2215 = vmatprep.mubr.bf16.mxu0 %v2120
    %2216 = vmatmul.mubr.bf16.gmra.mxu0 %v2119
    %v2217 = vpop.f32.mrf.mxu0
    %v2218 = vadd.f32 0.0, %v2217
    %v2219 = vpop.f32.mrf.mxu0
    %v2220 = vadd.f32 0.0, %v2219
    %v2221 = vpop.f32.mrf.mxu0
    %v2222 = vadd.f32 0.0, %v2221
    %v2223 = vpop.f32.mrf.mxu0
    %v2224 = vadd.f32 0.0, %v2223
    %2225 = vdwg.mxu0
    %2226 = vmatprep.subr.bf16.mxu0 %v1638
    %2227 = vmatpush1.bf16.msra.mxu0 %v1637
    %2228 = vmatprep.subr.bf16.mxu0 %v1634
    %2229 = vmatpush1.bf16.msra.mxu0 %v1633
    %2230 = vmatprep.subr.bf16.mxu0 %v1630
    %2231 = vmatpush1.bf16.msra.mxu0 %v1629
    %2232 = vmatprep.subr.bf16.mxu0 %v1626
    %2233 = vmatpush1.bf16.msra.mxu0 %v1625
    %2234 = vmatprep.subr.bf16.mxu0 %v997
    %2235 = vmatpush1.bf16.msra.mxu0 %v996
    %2236 = vmatprep.subr.bf16.mxu0 %v993
    %2237 = vmatpush1.bf16.msra.mxu0 %v992
    %2238 = vmatprep.subr.bf16.mxu0 %v989
    %2239 = vmatpush1.bf16.msra.mxu0 %v988
    %2240 = vmatprep.subr.bf16.mxu0 %v985
    %2241 = vmatpush1.bf16.msra.mxu0 %v984
    %2242 = vmatprep.subr.bf16.mxu0 %v1884
    %2243 = vmatpush2.bf16.msra.mxu0 %v1883
    %2244 = vmatprep.subr.bf16.mxu0 %v1880
    %2245 = vmatpush2.bf16.msra.mxu0 %v1879
    %2246 = vmatprep.subr.bf16.mxu0 %v1876
    %2247 = vmatpush2.bf16.msra.mxu0 %v1875
    %2248 = vmatprep.subr.bf16.mxu0 %v1872
    %2249 = vmatpush2.bf16.msra.mxu0 %v1871
    %2250 = vmatprep.subr.bf16.mxu0 %v1767
    %2251 = vmatpush2.bf16.msra.mxu0 %v1766
    %2252 = vmatprep.subr.bf16.mxu0 %v1763
    %2253 = vmatpush2.bf16.msra.mxu0 %v1762
    %2254 = vmatprep.subr.bf16.mxu0 %v1759
    %2255 = vmatpush2.bf16.msra.mxu0 %v1758
    %2256 = vmatprep.subr.bf16.mxu0 %v1755
    %2257 = vmatpush2.bf16.msra.mxu0 %v1754
    %2258 = vmatprep.mubr.bf16.mxu0 %v2107
    %2259 = vmatmul.mubr.bf16.gmra.mxu0 %v2106
    %v2260 = vpop.f32.mrf.mxu0
    %v2261 = vadd.f32 %v2188, %v2260
    %v2262 = vpop.f32.mrf.mxu0
    %v2263 = vadd.f32 %v2190, %v2262
    %v2264 = vpop.f32.mrf.mxu0
    %v2265 = vadd.f32 %v2192, %v2264
    %v2266 = vpop.f32.mrf.mxu0
    %v2267 = vadd.f32 %v2194, %v2266
    %2268 = vmatprep.mubr.bf16.mxu0 %v2112
    %2269 = vmatmul.mubr.bf16.gmra.mxu0 %v2111
    %v2270 = vpop.f32.mrf.mxu0
    %v2271 = vadd.f32 %v2198, %v2270
    %v2272 = vpop.f32.mrf.mxu0
    %v2273 = vadd.f32 %v2200, %v2272
    %v2274 = vpop.f32.mrf.mxu0
    %v2275 = vadd.f32 %v2202, %v2274
    %v2276 = vpop.f32.mrf.mxu0
    %v2277 = vadd.f32 %v2204, %v2276
    %2278 = vmatprep.mubr.bf16.mxu0 %v2117
    %2279 = vmatmul.mubr.bf16.gmra.mxu0 %v2116
    %v2280 = vpop.f32.mrf.mxu0
    %v2281 = vadd.f32 %v2208, %v2280
    %v2282 = vpop.f32.mrf.mxu0
    %v2283 = vadd.f32 %v2210, %v2282
    %v2284 = vpop.f32.mrf.mxu0
    %v2285 = vadd.f32 %v2212, %v2284
    %v2286 = vpop.f32.mrf.mxu0
    %v2287 = vadd.f32 %v2214, %v2286
    %2288 = vmatprep.mubr.bf16.mxu0 %v2122
    %2289 = vmatmul.mubr.bf16.gmra.mxu0 %v2121
    %v2290 = vpop.f32.mrf.mxu0
    %v2291 = vadd.f32 %v2218, %v2290
    %v2292 = vpop.f32.mrf.mxu0
    %v2293 = vadd.f32 %v2220, %v2292
    %v2294 = vpop.f32.mrf.mxu0
    %v2295 = vadd.f32 %v2222, %v2294
    %v2296 = vpop.f32.mrf.mxu0
    %v2297 = vadd.f32 %v2224, %v2296
    %2298 = vdwg.mxu0
    %2299 = vmatprep.subr.bf16.mxu0 0
    %2300 = vmatpush1.bf16.msra.mxu0 0
    %2301 = vmatprep.subr.bf16.mxu0 0
    %2302 = vmatpush1.bf16.msra.mxu0 0
    %2303 = vmatprep.subr.bf16.mxu0 0
    %2304 = vmatpush1.bf16.msra.mxu0 0
    %2305 = vmatprep.subr.bf16.mxu0 0
    %2306 = vmatpush1.bf16.msra.mxu0 0
    %2307 = vmatprep.subr.bf16.mxu0 %v2013
    %2308 = vmatpush1.bf16.msra.mxu0 %v2012
    %2309 = vmatprep.subr.bf16.mxu0 %v2009
    %2310 = vmatpush1.bf16.msra.mxu0 %v2008
    %2311 = vmatprep.subr.bf16.mxu0 %v2005
    %2312 = vmatpush1.bf16.msra.mxu0 %v2004
    %2313 = vmatprep.subr.bf16.mxu0 %v2001
    %2314 = vmatpush1.bf16.msra.mxu0 %v2000
    %2315 = vmatprep.subr.bf16.mxu0 0
    %2316 = vmatpush2.bf16.msra.mxu0 0
    %2317 = vmatprep.subr.bf16.mxu0 0
    %2318 = vmatpush2.bf16.msra.mxu0 0
    %2319 = vmatprep.subr.bf16.mxu0 0
    %2320 = vmatpush2.bf16.msra.mxu0 0
    %2321 = vmatprep.subr.bf16.mxu0 0
    %2322 = vmatpush2.bf16.msra.mxu0 0
    %2323 = vmatprep.subr.bf16.mxu0 0
    %2324 = vmatpush2.bf16.msra.mxu0 0
    %2325 = vmatprep.subr.bf16.mxu0 0
    %2326 = vmatpush2.bf16.msra.mxu0 0
    %2327 = vmatprep.subr.bf16.mxu0 0
    %2328 = vmatpush2.bf16.msra.mxu0 0
    %2329 = vmatprep.subr.bf16.mxu0 0
    %2330 = vmatpush2.bf16.msra.mxu0 0
    %2331 = vmatprep.mubr.bf16.mxu0 0
    %2332 = vmatmul.mubr.bf16.gmra.mxu0 %v2142
    %v2333 = vpop.f32.mrf.mxu0
    %v2334 = vadd.f32 %v2261, %v2333
    %v2335 = vpop.f32.mrf.mxu0
    %v2336 = vadd.f32 %v2263, %v2335
    %v2337 = vpop.f32.mrf.mxu0
    %v2338 = vadd.f32 %v2265, %v2337
    %v2339 = vpop.f32.mrf.mxu0
    %v2340 = vadd.f32 %v2267, %v2339
    %2341 = vmatprep.mubr.bf16.mxu0 0
    %2342 = vmatmul.mubr.bf16.gmra.mxu0 %v2145
    %v2343 = vpop.f32.mrf.mxu0
    %v2344 = vadd.f32 %v2271, %v2343
    %v2345 = vpop.f32.mrf.mxu0
    %v2346 = vadd.f32 %v2273, %v2345
    %v2347 = vpop.f32.mrf.mxu0
    %v2348 = vadd.f32 %v2275, %v2347
    %v2349 = vpop.f32.mrf.mxu0
    %v2350 = vadd.f32 %v2277, %v2349
    %2351 = vmatprep.mubr.bf16.mxu0 0
    %2352 = vmatmul.mubr.bf16.gmra.mxu0 %v2148
    %v2353 = vpop.f32.mrf.mxu0
    %v2354 = vadd.f32 %v2281, %v2353
    %v2355 = vpop.f32.mrf.mxu0
    %v2356 = vadd.f32 %v2283, %v2355
    %v2357 = vpop.f32.mrf.mxu0
    %v2358 = vadd.f32 %v2285, %v2357
    %v2359 = vpop.f32.mrf.mxu0
    %v2360 = vadd.f32 %v2287, %v2359
    %2361 = vmatprep.mubr.bf16.mxu0 0
    %2362 = vmatmul.mubr.bf16.gmra.mxu0 %v2151
    %v2363 = vpop.f32.mrf.mxu0
    %v2364 = vadd.f32 %v2291, %v2363
    %v2365 = vpop.f32.mrf.mxu0
    %v2366 = vadd.f32 %v2293, %v2365
    %v2367 = vpop.f32.mrf.mxu0
    %v2368 = vadd.f32 %v2295, %v2367
    %v2369 = vpop.f32.mrf.mxu0
    %v2370 = vadd.f32 %v2297, %v2369
    %2371 = vdwg.mxu0
    %2372 = vmatprep.subr.bf16.mxu0 %v1261
    %2373 = vmatpush1.bf16.msra.mxu0 %v1260
    %2374 = vmatprep.subr.bf16.mxu0 %v1257
    %2375 = vmatpush1.bf16.msra.mxu0 %v1256
    %2376 = vmatprep.subr.bf16.mxu0 %v1253
    %2377 = vmatpush1.bf16.msra.mxu0 %v1252
    %2378 = vmatprep.subr.bf16.mxu0 %v1249
    %2379 = vmatpush1.bf16.msra.mxu0 %v1248
    %2380 = vmatprep.subr.bf16.mxu0 %v1144
    %2381 = vmatpush1.bf16.msra.mxu0 %v1143
    %2382 = vmatprep.subr.bf16.mxu0 %v1140
    %2383 = vmatpush1.bf16.msra.mxu0 %v1139
    %2384 = vmatprep.subr.bf16.mxu0 %v1136
    %2385 = vmatpush1.bf16.msra.mxu0 %v1135
    %2386 = vmatprep.subr.bf16.mxu0 %v1132
    %2387 = vmatpush1.bf16.msra.mxu0 %v1131
    %2388 = vmatprep.subr.bf16.mxu0 %v1507
    %2389 = vmatpush2.bf16.msra.mxu0 %v1506
    %2390 = vmatprep.subr.bf16.mxu0 %v1503
    %2391 = vmatpush2.bf16.msra.mxu0 %v1502
    %2392 = vmatprep.subr.bf16.mxu0 %v1499
    %2393 = vmatpush2.bf16.msra.mxu0 %v1498
    %2394 = vmatprep.subr.bf16.mxu0 %v1495
    %2395 = vmatpush2.bf16.msra.mxu0 %v1494
    %2396 = vmatprep.subr.bf16.mxu0 %v1390
    %2397 = vmatpush2.bf16.msra.mxu0 %v1389
    %2398 = vmatprep.subr.bf16.mxu0 %v1386
    %2399 = vmatpush2.bf16.msra.mxu0 %v1385
    %2400 = vmatprep.subr.bf16.mxu0 %v1382
    %2401 = vmatpush2.bf16.msra.mxu0 %v1381
    %2402 = vmatprep.subr.bf16.mxu0 %v1378
    %2403 = vmatpush2.bf16.msra.mxu0 %v1377
    %2404 = vmatprep.mubr.bf16.mxu0 %v2105
    %2405 = vmatmul.mubr.bf16.gmra.mxu0 %v2104
    %v2406 = vpop.f32.mrf.mxu0
    %v2407 = vadd.f32 0.0, %v2406
    %v2408 = vpop.f32.mrf.mxu0
    %v2409 = vadd.f32 0.0, %v2408
    %v2410 = vpop.f32.mrf.mxu0
    %v2411 = vadd.f32 0.0, %v2410
    %v2412 = vpop.f32.mrf.mxu0
    %v2413 = vadd.f32 0.0, %v2412
    %2414 = vmatprep.mubr.bf16.mxu0 %v2110
    %2415 = vmatmul.mubr.bf16.gmra.mxu0 %v2109
    %v2416 = vpop.f32.mrf.mxu0
    %v2417 = vadd.f32 0.0, %v2416
    %v2418 = vpop.f32.mrf.mxu0
    %v2419 = vadd.f32 0.0, %v2418
    %v2420 = vpop.f32.mrf.mxu0
    %v2421 = vadd.f32 0.0, %v2420
    %v2422 = vpop.f32.mrf.mxu0
    %v2423 = vadd.f32 0.0, %v2422
    %2424 = vmatprep.mubr.bf16.mxu0 %v2115
    %2425 = vmatmul.mubr.bf16.gmra.mxu0 %v2114
    %v2426 = vpop.f32.mrf.mxu0
    %v2427 = vadd.f32 0.0, %v2426
    %v2428 = vpop.f32.mrf.mxu0
    %v2429 = vadd.f32 0.0, %v2428
    %v2430 = vpop.f32.mrf.mxu0
    %v2431 = vadd.f32 0.0, %v2430
    %v2432 = vpop.f32.mrf.mxu0
    %v2433 = vadd.f32 0.0, %v2432
    %2434 = vmatprep.mubr.bf16.mxu0 %v2120
    %2435 = vmatmul.mubr.bf16.gmra.mxu0 %v2119
    %v2436 = vpop.f32.mrf.mxu0
    %v2437 = vadd.f32 0.0, %v2436
    %v2438 = vpop.f32.mrf.mxu0
    %v2439 = vadd.f32 0.0, %v2438
    %v2440 = vpop.f32.mrf.mxu0
    %v2441 = vadd.f32 0.0, %v2440
    %v2442 = vpop.f32.mrf.mxu0
    %v2443 = vadd.f32 0.0, %v2442
    %2444 = vdwg.mxu0
    %2445 = vmatprep.subr.bf16.mxu0 %v1640
    %2446 = vmatpush1.bf16.msra.mxu0 %v1639
    %2447 = vmatprep.subr.bf16.mxu0 %v1636
    %2448 = vmatpush1.bf16.msra.mxu0 %v1635
    %2449 = vmatprep.subr.bf16.mxu0 %v1632
    %2450 = vmatpush1.bf16.msra.mxu0 %v1631
    %2451 = vmatprep.subr.bf16.mxu0 %v1628
    %2452 = vmatpush1.bf16.msra.mxu0 %v1627
    %2453 = vmatprep.subr.bf16.mxu0 %v999
    %2454 = vmatpush1.bf16.msra.mxu0 %v998
    %2455 = vmatprep.subr.bf16.mxu0 %v995
    %2456 = vmatpush1.bf16.msra.mxu0 %v994
    %2457 = vmatprep.subr.bf16.mxu0 %v991
    %2458 = vmatpush1.bf16.msra.mxu0 %v990
    %2459 = vmatprep.subr.bf16.mxu0 %v987
    %2460 = vmatpush1.bf16.msra.mxu0 %v986
    %2461 = vmatprep.subr.bf16.mxu0 %v1886
    %2462 = vmatpush2.bf16.msra.mxu0 %v1885
    %2463 = vmatprep.subr.bf16.mxu0 %v1882
    %2464 = vmatpush2.bf16.msra.mxu0 %v1881
    %2465 = vmatprep.subr.bf16.mxu0 %v1878
    %2466 = vmatpush2.bf16.msra.mxu0 %v1877
    %2467 = vmatprep.subr.bf16.mxu0 %v1874
    %2468 = vmatpush2.bf16.msra.mxu0 %v1873
    %2469 = vmatprep.subr.bf16.mxu0 %v1769
    %2470 = vmatpush2.bf16.msra.mxu0 %v1768
    %2471 = vmatprep.subr.bf16.mxu0 %v1765
    %2472 = vmatpush2.bf16.msra.mxu0 %v1764
    %2473 = vmatprep.subr.bf16.mxu0 %v1761
    %2474 = vmatpush2.bf16.msra.mxu0 %v1760
    %2475 = vmatprep.subr.bf16.mxu0 %v1757
    %2476 = vmatpush2.bf16.msra.mxu0 %v1756
    %2477 = vmatprep.mubr.bf16.mxu0 %v2107
    %2478 = vmatmul.mubr.bf16.gmra.mxu0 %v2106
    %v2479 = vpop.f32.mrf.mxu0
    %v2480 = vadd.f32 %v2407, %v2479
    %v2481 = vpop.f32.mrf.mxu0
    %v2482 = vadd.f32 %v2409, %v2481
    %v2483 = vpop.f32.mrf.mxu0
    %v2484 = vadd.f32 %v2411, %v2483
    %v2485 = vpop.f32.mrf.mxu0
    %v2486 = vadd.f32 %v2413, %v2485
    %2487 = vmatprep.mubr.bf16.mxu0 %v2112
    %2488 = vmatmul.mubr.bf16.gmra.mxu0 %v2111
    %v2489 = vpop.f32.mrf.mxu0
    %v2490 = vadd.f32 %v2417, %v2489
    %v2491 = vpop.f32.mrf.mxu0
    %v2492 = vadd.f32 %v2419, %v2491
    %v2493 = vpop.f32.mrf.mxu0
    %v2494 = vadd.f32 %v2421, %v2493
    %v2495 = vpop.f32.mrf.mxu0
    %v2496 = vadd.f32 %v2423, %v2495
    %2497 = vmatprep.mubr.bf16.mxu0 %v2117
    %2498 = vmatmul.mubr.bf16.gmra.mxu0 %v2116
    %v2499 = vpop.f32.mrf.mxu0
    %v2500 = vadd.f32 %v2427, %v2499
    %v2501 = vpop.f32.mrf.mxu0
    %v2502 = vadd.f32 %v2429, %v2501
    %v2503 = vpop.f32.mrf.mxu0
    %v2504 = vadd.f32 %v2431, %v2503
    %v2505 = vpop.f32.mrf.mxu0
    %v2506 = vadd.f32 %v2433, %v2505
    %2507 = vmatprep.mubr.bf16.mxu0 %v2122
    %2508 = vmatmul.mubr.bf16.gmra.mxu0 %v2121
    %v2509 = vpop.f32.mrf.mxu0
    %v2510 = vadd.f32 %v2437, %v2509
    %v2511 = vpop.f32.mrf.mxu0
    %v2512 = vadd.f32 %v2439, %v2511
    %v2513 = vpop.f32.mrf.mxu0
    %v2514 = vadd.f32 %v2441, %v2513
    %v2515 = vpop.f32.mrf.mxu0
    %v2516 = vadd.f32 %v2443, %v2515
    %2517 = vdwg.mxu0
    %2518 = vmatprep.subr.bf16.mxu0 0
    %2519 = vmatpush1.bf16.msra.mxu0 0
    %2520 = vmatprep.subr.bf16.mxu0 0
    %2521 = vmatpush1.bf16.msra.mxu0 0
    %2522 = vmatprep.subr.bf16.mxu0 0
    %2523 = vmatpush1.bf16.msra.mxu0 0
    %2524 = vmatprep.subr.bf16.mxu0 0
    %2525 = vmatpush1.bf16.msra.mxu0 0
    %2526 = vmatprep.subr.bf16.mxu0 %v2015
    %2527 = vmatpush1.bf16.msra.mxu0 %v2014
    %2528 = vmatprep.subr.bf16.mxu0 %v2011
    %2529 = vmatpush1.bf16.msra.mxu0 %v2010
    %2530 = vmatprep.subr.bf16.mxu0 %v2007
    %2531 = vmatpush1.bf16.msra.mxu0 %v2006
    %2532 = vmatprep.subr.bf16.mxu0 %v2003
    %2533 = vmatpush1.bf16.msra.mxu0 %v2002
    %2534 = vmatprep.subr.bf16.mxu0 0
    %2535 = vmatpush2.bf16.msra.mxu0 0
    %2536 = vmatprep.subr.bf16.mxu0 0
    %2537 = vmatpush2.bf16.msra.mxu0 0
    %2538 = vmatprep.subr.bf16.mxu0 0
    %2539 = vmatpush2.bf16.msra.mxu0 0
    %2540 = vmatprep.subr.bf16.mxu0 0
    %2541 = vmatpush2.bf16.msra.mxu0 0
    %2542 = vmatprep.subr.bf16.mxu0 0
    %2543 = vmatpush2.bf16.msra.mxu0 0
    %2544 = vmatprep.subr.bf16.mxu0 0
    %2545 = vmatpush2.bf16.msra.mxu0 0
    %2546 = vmatprep.subr.bf16.mxu0 0
    %2547 = vmatpush2.bf16.msra.mxu0 0
    %2548 = vmatprep.subr.bf16.mxu0 0
    %2549 = vmatpush2.bf16.msra.mxu0 0
    %2550 = vmatprep.mubr.bf16.mxu0 0
    %2551 = vmatmul.mubr.bf16.gmra.mxu0 %v2142
    %v2552 = vpop.f32.mrf.mxu0
    %v2553 = vadd.f32 %v2480, %v2552
    %v2554 = vpop.f32.mrf.mxu0
    %v2555 = vadd.f32 %v2482, %v2554
    %v2556 = vpop.f32.mrf.mxu0
    %v2557 = vadd.f32 %v2484, %v2556
    %v2558 = vpop.f32.mrf.mxu0
    %v2559 = vadd.f32 %v2486, %v2558
    %2560 = vmatprep.mubr.bf16.mxu0 0
    %2561 = vmatmul.mubr.bf16.gmra.mxu0 %v2145
    %v2562 = vpop.f32.mrf.mxu0
    %v2563 = vadd.f32 %v2490, %v2562
    %v2564 = vpop.f32.mrf.mxu0
    %v2565 = vadd.f32 %v2492, %v2564
    %v2566 = vpop.f32.mrf.mxu0
    %v2567 = vadd.f32 %v2494, %v2566
    %v2568 = vpop.f32.mrf.mxu0
    %v2569 = vadd.f32 %v2496, %v2568
    %2570 = vmatprep.mubr.bf16.mxu0 0
    %2571 = vmatmul.mubr.bf16.gmra.mxu0 %v2148
    %v2572 = vpop.f32.mrf.mxu0
    %v2573 = vadd.f32 %v2500, %v2572
    %v2574 = vpop.f32.mrf.mxu0
    %v2575 = vadd.f32 %v2502, %v2574
    %v2576 = vpop.f32.mrf.mxu0
    %v2577 = vadd.f32 %v2504, %v2576
    %v2578 = vpop.f32.mrf.mxu0
    %v2579 = vadd.f32 %v2506, %v2578
    %2580 = vmatprep.mubr.bf16.mxu0 0
    %2581 = vmatmul.mubr.bf16.gmra.mxu0 %v2151
    %v2582 = vpop.f32.mrf.mxu0
    %v2583 = vadd.f32 %v2510, %v2582
    %v2584 = vpop.f32.mrf.mxu0
    %v2585 = vadd.f32 %v2512, %v2584
    %v2586 = vpop.f32.mrf.mxu0
    %v2587 = vadd.f32 %v2514, %v2586
    %v2588 = vpop.f32.mrf.mxu0
    %v2589 = vadd.f32 %v2516, %v2588
    %2590 = vdwg.mxu0
    %v2591 = vld [vmem:[%s9] sm:$0xff]
    %v2592 = vld [vmem:[%s9 + $0x8] sm:$0xff]
    %v2593 = vld [vmem:[%s9 + $0x10] sm:$0xff]
    %v2594 = vld [vmem:[%s9 + $0x18] sm:$0xff]
    %v2595 = vld [vmem:[%s9 + $0x20] sm:$0xff]
    %v2596 = vld [vmem:[%s9 + $0x28] sm:$0xff]
    %v2597 = vld [vmem:[%s9 + $0x30] sm:$0xff]
    %v2598 = vld [vmem:[%s9 + $0x38] sm:$0xff]
    %2600 = vset.pattern.permute.xlu0 0
    %2601 = vperm.xlu0 %2600, %v2591
    %v2602 = vpop.permute.xlu0 %2601
    %2605 = vset.pattern.permute.xlu0 0
    %2606 = vperm.xlu0 %2605, %v2592
    %v2607 = vpop.permute.xlu0 %2606
    %2610 = vset.pattern.permute.xlu0 0
    %2611 = vperm.xlu0 %2610, %v2593
    %v2612 = vpop.permute.xlu0 %2611
    %2615 = vset.pattern.permute.xlu0 0
    %2616 = vperm.xlu0 %2615, %v2594
    %v2617 = vpop.permute.xlu0 %2616
    %2620 = vset.pattern.permute.xlu0 0
    %2621 = vperm.xlu0 %2620, %v2595
    %v2622 = vpop.permute.xlu0 %2621
    %2625 = vset.pattern.permute.xlu0 0
    %2626 = vperm.xlu0 %2625, %v2596
    %v2627 = vpop.permute.xlu0 %2626
    %2630 = vset.pattern.permute.xlu0 0
    %2631 = vperm.xlu0 %2630, %v2597
    %v2632 = vpop.permute.xlu0 %2631
    %2635 = vset.pattern.permute.xlu0 0
    %2636 = vperm.xlu0 %2635, %v2598
    %v2637 = vpop.permute.xlu0 %2636
    %v2639 = vmul.f32 %v2334, %v2602
    %v2640 = vmul.f32 %v2336, %v2602
    %v2641 = vmul.f32 %v2553, %v2602
    %v2642 = vmul.f32 %v2555, %v2602
    %v2643 = vmul.f32 %v2338, %v2607
    %v2644 = vmul.f32 %v2340, %v2607
    %v2645 = vmul.f32 %v2557, %v2607
    %v2646 = vmul.f32 %v2559, %v2607
    %v2647 = vmul.f32 %v2344, %v2612
    %v2648 = vmul.f32 %v2346, %v2612
    %v2649 = vmul.f32 %v2563, %v2612
    %v2650 = vmul.f32 %v2565, %v2612
    %v2651 = vmul.f32 %v2348, %v2617
    %v2652 = vmul.f32 %v2350, %v2617
    %v2653 = vmul.f32 %v2567, %v2617
    %v2654 = vmul.f32 %v2569, %v2617
    %v2655 = vmul.f32 %v2354, %v2622
    %v2656 = vmul.f32 %v2356, %v2622
    %v2657 = vmul.f32 %v2573, %v2622
    %v2658 = vmul.f32 %v2575, %v2622
    %v2659 = vmul.f32 %v2358, %v2627
    %v2660 = vmul.f32 %v2360, %v2627
    %v2661 = vmul.f32 %v2577, %v2627
    %v2662 = vmul.f32 %v2579, %v2627
    %v2663 = vmul.f32 %v2364, %v2632
    %v2664 = vmul.f32 %v2366, %v2632
    %v2665 = vmul.f32 %v2583, %v2632
    %v2666 = vmul.f32 %v2585, %v2632
    %v2667 = vmul.f32 %v2368, %v2637
    %v2668 = vmul.f32 %v2370, %v2637
    %v2669 = vmul.f32 %v2587, %v2637
    %v2670 = vmul.f32 %v2589, %v2637
    %v2671 = vld [vmem:[%s10] sm:$0xff]
    %v2672 = vld [vmem:[%s10 + $0x8] sm:$0xff]
    %v2673 = vld [vmem:[%s10 + $0x10] sm:$0xff]
    %v2674 = vld [vmem:[%s10 + $0x18] sm:$0xff]
    %v2675 = vld [vmem:[%s10 + $0x20] sm:$0xff]
    %v2676 = vld [vmem:[%s10 + $0x28] sm:$0xff]
    %v2677 = vld [vmem:[%s10 + $0x30] sm:$0xff]
    %v2678 = vld [vmem:[%s10 + $0x38] sm:$0xff]
    %2680 = vset.pattern.permute.xlu0 0
    %2681 = vperm.xlu0 %2680, %v2671
    %v2682 = vpop.permute.xlu0 %2681
    %2685 = vset.pattern.permute.xlu0 0
    %2686 = vperm.xlu0 %2685, %v2672
    %v2687 = vpop.permute.xlu0 %2686
    %2690 = vset.pattern.permute.xlu0 0
    %2691 = vperm.xlu0 %2690, %v2673
    %v2692 = vpop.permute.xlu0 %2691
    %2695 = vset.pattern.permute.xlu0 0
    %2696 = vperm.xlu0 %2695, %v2674
    %v2697 = vpop.permute.xlu0 %2696
    %2700 = vset.pattern.permute.xlu0 0
    %2701 = vperm.xlu0 %2700, %v2675
    %v2702 = vpop.permute.xlu0 %2701
    %2705 = vset.pattern.permute.xlu0 0
    %2706 = vperm.xlu0 %2705, %v2676
    %v2707 = vpop.permute.xlu0 %2706
    %2710 = vset.pattern.permute.xlu0 0
    %2711 = vperm.xlu0 %2710, %v2677
    %v2712 = vpop.permute.xlu0 %2711
    %2715 = vset.pattern.permute.xlu0 0
    %2716 = vperm.xlu0 %2715, %v2678
    %v2717 = vpop.permute.xlu0 %2716
    %v2719 = vadd.f32 %v2639, %v2682
    %v2720 = vadd.f32 %v2640, %v2682
    %v2721 = vadd.f32 %v2641, %v2682
    %v2722 = vadd.f32 %v2642, %v2682
    %v2723 = vadd.f32 %v2643, %v2687
    %v2724 = vadd.f32 %v2644, %v2687
    %v2725 = vadd.f32 %v2645, %v2687
    %v2726 = vadd.f32 %v2646, %v2687
    %v2727 = vadd.f32 %v2647, %v2692
    %v2728 = vadd.f32 %v2648, %v2692
    %v2729 = vadd.f32 %v2649, %v2692
    %v2730 = vadd.f32 %v2650, %v2692
    %v2731 = vadd.f32 %v2651, %v2697
    %v2732 = vadd.f32 %v2652, %v2697
    %v2733 = vadd.f32 %v2653, %v2697
    %v2734 = vadd.f32 %v2654, %v2697
    %v2735 = vadd.f32 %v2655, %v2702
    %v2736 = vadd.f32 %v2656, %v2702
    %v2737 = vadd.f32 %v2657, %v2702
    %v2738 = vadd.f32 %v2658, %v2702
    %v2739 = vadd.f32 %v2659, %v2707
    %v2740 = vadd.f32 %v2660, %v2707
    %v2741 = vadd.f32 %v2661, %v2707
    %v2742 = vadd.f32 %v2662, %v2707
    %v2743 = vadd.f32 %v2663, %v2712
    %v2744 = vadd.f32 %v2664, %v2712
    %v2745 = vadd.f32 %v2665, %v2712
    %v2746 = vadd.f32 %v2666, %v2712
    %v2747 = vadd.f32 %v2667, %v2717
    %v2748 = vadd.f32 %v2668, %v2717
    %v2749 = vadd.f32 %v2669, %v2717
    %v2750 = vadd.f32 %v2670, %v2717
    %v2751 = vmax.f32 %v2719, 0.0
    %v2752 = vmax.f32 %v2720, 0.0
    %v2753 = vmax.f32 %v2721, 0.0
    %v2754 = vmax.f32 %v2722, 0.0
    %v2755 = vmax.f32 %v2723, 0.0
    %v2756 = vmax.f32 %v2724, 0.0
    %v2757 = vmax.f32 %v2725, 0.0
    %v2758 = vmax.f32 %v2726, 0.0
    %v2759 = vmax.f32 %v2727, 0.0
    %v2760 = vmax.f32 %v2728, 0.0
    %v2761 = vmax.f32 %v2729, 0.0
    %v2762 = vmax.f32 %v2730, 0.0
    %v2763 = vmax.f32 %v2731, 0.0
    %v2764 = vmax.f32 %v2732, 0.0
    %v2765 = vmax.f32 %v2733, 0.0
    %v2766 = vmax.f32 %v2734, 0.0
    %v2767 = vmax.f32 %v2735, 0.0
    %v2768 = vmax.f32 %v2736, 0.0
    %v2769 = vmax.f32 %v2737, 0.0
    %v2770 = vmax.f32 %v2738, 0.0
    %v2771 = vmax.f32 %v2739, 0.0
    %v2772 = vmax.f32 %v2740, 0.0
    %v2773 = vmax.f32 %v2741, 0.0
    %v2774 = vmax.f32 %v2742, 0.0
    %v2775 = vmax.f32 %v2743, 0.0
    %v2776 = vmax.f32 %v2744, 0.0
    %v2777 = vmax.f32 %v2745, 0.0
    %v2778 = vmax.f32 %v2746, 0.0
    %v2779 = vmax.f32 %v2747, 0.0
    %v2780 = vmax.f32 %v2748, 0.0
    %v2781 = vmax.f32 %v2749, 0.0
    %v2782 = vmax.f32 %v2750, 0.0
    %v2783 = vld [vmem:[%s11] sm:$0x3]
    %v2784 = vpack.c.bf16 %v2755, %v2751
    %v2785 = vpack.c.bf16 %v2756, %v2752
    %v2786 = vpack.c.bf16 %v2757, %v2753
    %v2787 = vpack.c.bf16 %v2758, %v2754
    %v2788 = vpack.c.bf16 %v2763, %v2759
    %v2789 = vpack.c.bf16 %v2764, %v2760
    %v2790 = vpack.c.bf16 %v2765, %v2761
    %v2791 = vpack.c.bf16 %v2766, %v2762
    %v2792 = vpack.c.bf16 %v2771, %v2767
    %v2793 = vpack.c.bf16 %v2772, %v2768
    %v2794 = vpack.c.bf16 %v2773, %v2769
    %v2795 = vpack.c.bf16 %v2774, %v2770
    %v2796 = vpack.c.bf16 %v2779, %v2775
    %v2797 = vpack.c.bf16 %v2780, %v2776
    %v2798 = vpack.c.bf16 %v2781, %v2777
    %v2799 = vpack.c.bf16 %v2782, %v2778
    %v2801 = vsel %vm2140, %v2783, 0
    %2803 = vmatprep.subr.bf16.mxu0 0
    %2804 = vmatpush1.bf16.msra.mxu0 0
    %2805 = vmatprep.subr.bf16.mxu0 0
    %2806 = vmatpush1.bf16.msra.mxu0 0
    %2807 = vmatprep.subr.bf16.mxu0 0
    %2808 = vmatpush1.bf16.msra.mxu0 0
    %2809 = vmatprep.subr.bf16.mxu0 0
    %2810 = vmatpush1.bf16.msra.mxu0 0
    %2811 = vmatprep.subr.bf16.mxu0 %v2797
    %2812 = vmatpush1.bf16.msra.mxu0 %v2796
    %2813 = vmatprep.subr.bf16.mxu0 %v2793
    %2814 = vmatpush1.bf16.msra.mxu0 %v2792
    %2815 = vmatprep.subr.bf16.mxu0 %v2789
    %2816 = vmatpush1.bf16.msra.mxu0 %v2788
    %2817 = vmatprep.subr.bf16.mxu0 %v2785
    %2818 = vmatpush1.bf16.msra.mxu0 %v2784
    %2819 = vmatprep.subr.bf16.mxu0 0
    %2820 = vmatpush2.bf16.msra.mxu0 0
    %2821 = vmatprep.subr.bf16.mxu0 0
    %2822 = vmatpush2.bf16.msra.mxu0 0
    %2823 = vmatprep.subr.bf16.mxu0 0
    %2824 = vmatpush2.bf16.msra.mxu0 0
    %2825 = vmatprep.subr.bf16.mxu0 0
    %2826 = vmatpush2.bf16.msra.mxu0 0
    %2827 = vmatprep.subr.bf16.mxu0 0
    %2828 = vmatpush2.bf16.msra.mxu0 0
    %2829 = vmatprep.subr.bf16.mxu0 0
    %2830 = vmatpush2.bf16.msra.mxu0 0
    %2831 = vmatprep.subr.bf16.mxu0 0
    %2832 = vmatpush2.bf16.msra.mxu0 0
    %2833 = vmatprep.subr.bf16.mxu0 0
    %2834 = vmatpush2.bf16.msra.mxu0 0
    %2835 = vmatprep.mubr.bf16.mxu0 0
    %2836 = vmatmul.mubr.bf16.gmra.mxu0 %v2801
    %v2837 = vpop.f32.mrf.mxu0
    %v2838 = vadd.f32 0.0, %v2837
    %v2839 = vpop.f32.mrf.mxu0
    %v2840 = vadd.f32 0.0, %v2839
    %v2841 = vpop.f32.mrf.mxu0
    %v2842 = vpop.f32.mrf.mxu0
    %2843 = vdwg.mxu0
    %2844 = vmatprep.subr.bf16.mxu0 0
    %2845 = vmatpush1.bf16.msra.mxu0 0
    %2846 = vmatprep.subr.bf16.mxu0 0
    %2847 = vmatpush1.bf16.msra.mxu0 0
    %2848 = vmatprep.subr.bf16.mxu0 0
    %2849 = vmatpush1.bf16.msra.mxu0 0
    %2850 = vmatprep.subr.bf16.mxu0 0
    %2851 = vmatpush1.bf16.msra.mxu0 0
    %2852 = vmatprep.subr.bf16.mxu0 %v2799
    %2853 = vmatpush1.bf16.msra.mxu0 %v2798
    %2854 = vmatprep.subr.bf16.mxu0 %v2795
    %2855 = vmatpush1.bf16.msra.mxu0 %v2794
    %2856 = vmatprep.subr.bf16.mxu0 %v2791
    %2857 = vmatpush1.bf16.msra.mxu0 %v2790
    %2858 = vmatprep.subr.bf16.mxu0 %v2787
    %2859 = vmatpush1.bf16.msra.mxu0 %v2786
    %2860 = vmatprep.subr.bf16.mxu0 0
    %2861 = vmatpush2.bf16.msra.mxu0 0
    %2862 = vmatprep.subr.bf16.mxu0 0
    %2863 = vmatpush2.bf16.msra.mxu0 0
    %2864 = vmatprep.subr.bf16.mxu0 0
    %2865 = vmatpush2.bf16.msra.mxu0 0
    %2866 = vmatprep.subr.bf16.mxu0 0
    %2867 = vmatpush2.bf16.msra.mxu0 0
    %2868 = vmatprep.subr.bf16.mxu0 0
    %2869 = vmatpush2.bf16.msra.mxu0 0
    %2870 = vmatprep.subr.bf16.mxu0 0
    %2871 = vmatpush2.bf16.msra.mxu0 0
    %2872 = vmatprep.subr.bf16.mxu0 0
    %2873 = vmatpush2.bf16.msra.mxu0 0
    %2874 = vmatprep.subr.bf16.mxu0 0
    %2875 = vmatpush2.bf16.msra.mxu0 0
    %2876 = vmatprep.mubr.bf16.mxu0 0
    %2877 = vmatmul.mubr.bf16.gmra.mxu0 %v2801
    %v2878 = vpop.f32.mrf.mxu0
    %v2879 = vadd.f32 0.0, %v2878
    %v2880 = vpop.f32.mrf.mxu0
    %v2881 = vadd.f32 0.0, %v2880
    %v2882 = vpop.f32.mrf.mxu0
    %v2883 = vpop.f32.mrf.mxu0
    %2884 = vdwg.mxu0
    %v2885 = vld [vmem:[%s12] sm:$0xf]
    %2887 = vset.pattern.permute.xlu0 0
    %2888 = vperm.xlu0 %2887, %v2885
    %v2889 = vpop.permute.xlu0 %2888
    %v2891 = vmul.f32 %v2838, %v2889
    %v2892 = vmul.f32 %v2840, %v2889
    %v2893 = vmul.f32 %v2879, %v2889
    %v2894 = vmul.f32 %v2881, %v2889
    %v2895 = vld [vmem:[%s13] sm:$0xf]
    %2897 = vset.pattern.permute.xlu0 0
    %2898 = vperm.xlu0 %2897, %v2895
    %v2899 = vpop.permute.xlu0 %2898
    %v2901 = vadd.f32 %v2891, %v2899
    %v2902 = vadd.f32 %v2892, %v2899
    %v2903 = vadd.f32 %v2893, %v2899
    %v2904 = vadd.f32 %v2894, %v2899
    %v2909 = vcombine.low %v2901, %v2902
    %v2910 = vcombine.low %v2903, %v2904
    %2913 = vst [vmem:[#allocation2] sm:$0xff] %v2909
    %2914 = vst [vmem:[#allocation2 + $0x8] sm:$0xff] %v2910
    // Predicated region
    $region58: #{tpu_custom_call.1} parent=1 // pred_check
      _
    $region59: #{tpu_custom_call.1} parent=1 // pred_check_branch
      %2916 = sbr.rel (0) target = $region61
    $region60: #{tpu_custom_call.1} parent=1 // pred_region
      %s2918 = ssub.s32 256, 256
      %2919 = vsyncadd [#allocation3], %s2918
      %s2921 = sshll.u32 [#allocation2], 4
      %s2922 = int_to_ptr.vmem [resolvable:$true] %s2921
      %2924 = dma.vmem_to_hbm [thread:$0]  %s2922, 256, %s14, [#allocation3]
    $region61: #{tpu_custom_call.1} parent=1 // pred_fallthru
      _
    // Predicated region
    $region62: #{tpu_custom_call.1} parent=1 // pred_check
      _
    $region63: #{tpu_custom_call.1} parent=1 // pred_check_branch
      %2926 = sbr.rel (0) target = $region65
    $region64: #{tpu_custom_call.1} parent=1 // pred_region
      %2927 = dma.done [#allocation3], 256
    $region65: #{tpu_custom_call.1} parent=1 // pred_fallthru
      _
    %2928 = vsyncpa [#allocation3], 1

</llo_original>
